<compile_context>
chip_gen: v7x
topology: tpu7x:2x2x1
jax: 0.10.0
libtpu: 0.0.40
codegen_flags: <defaults>
</compile_context>

<pallas_src>
import functools

import jax
import jax.numpy as jnp
from jax import lax
from jax.experimental import pallas as pl
from jax.experimental.pallas import tpu as pltpu

_EPS = 1e-12       # PyTorch module uses arr / (||arr|| + 1e-12)
_EPS_SQ = 1e-24    # equivalent guard for x * rsqrt(sum(x^2) + eps^2)


def _round_up(x, m):
    return ((x + m - 1) // m) * m


def _vmem_limit_bytes(resident_bytes):
    # Single-buffered residents + slack, capped at ~80% of this generation's
    # physical VMEM (128 MiB on v5e/v6e, 64 MiB on v7x).
    try:
        cap = int(pltpu.get_tpu_info().vmem_capacity_bytes)
    except Exception:
        cap = 128 << 20
    cap = int(cap * 0.8)
    need = int(resident_bytes) + (4 << 20)
    return int(max(8 << 20, min(need, cap)))


# ----------------------------------------------------------------------------
# Dense path
# ----------------------------------------------------------------------------
def _dense_kernel(M_ref, Mt_ref, u0_ref, sigma_ref, *, max_iter, compute_dtype):
    # M_ref: (m, n), Mt_ref: (n, m) (host-prepared transpose; no per-iteration
    # transposed MXU feed). u0: (1, n) f32. sigma: (1, 1) f32.
    assert max_iter >= 1
    u = u0_ref[...]                                   # (1, n) f32, value-carried
    w_sq = u_sq = None
    for _ in range(max_iter):                         # static unroll
        # w^T = (M u)^T : row-vector @ Mt on the MXU, f32 accumulate.
        w = jnp.dot(u.astype(compute_dtype), Mt_ref[...],
                    preferred_element_type=jnp.float32)          # (1, m)
        w_sq = jnp.sum(w * w, keepdims=True)                     # (1, 1)
        # u_new^T = (M^T w)^T  (scale of w cancels in the normalization)
        u_new = jnp.dot(w.astype(compute_dtype), M_ref[...],
                        preferred_element_type=jnp.float32)      # (1, n)
        u_sq = jnp.sum(u_new * u_new, keepdims=True)             # (1, 1)
        u = u_new * lax.rsqrt(u_sq + _EPS_SQ)
    # sigma = <M u_hat, v_hat> = ||M^T w|| / ||w||  (adjoint identity; differs
    # from the eps-regularized reference only by ~1e-12-level terms).
    sigma_ref[...] = jnp.sqrt(u_sq) * lax.rsqrt(w_sq + _EPS_SQ)


def _dense_sigma(M, u0, max_iter, compute_dtype=jnp.bfloat16):
    assert max_iter >= 1, "power iteration needs max_iter >= 1"
    m, n = M.shape
    M32 = M.astype(jnp.float32)
    Mc = M32.astype(compute_dtype)        # (m, n)
    Mtc = M32.T.astype(compute_dtype)     # (n, m)
    u0r = u0.reshape(1, n).astype(jnp.float32)

    resident = (Mc.size + Mtc.size) * jnp.dtype(compute_dtype).itemsize + 4 * (n + m)

    kernel = functools.partial(_dense_kernel, max_iter=int(max_iter),
                               compute_dtype=compute_dtype)
    out = pl.pallas_call(
        kernel,
        out_shape=jax.ShapeDtypeStruct((1, 1), jnp.float32),
        in_specs=[pl.BlockSpec(memory_space=pltpu.MemorySpace.VMEM)
                  for _ in range(3)],
        out_specs=pl.BlockSpec(memory_space=pltpu.MemorySpace.VMEM),
        compiler_params=pltpu.CompilerParams(
            vmem_limit_bytes=_vmem_limit_bytes(resident)),
    )(Mc, Mtc, u0r)
    return out[0, 0]


# ----------------------------------------------------------------------------
# Conv path (3x3, pad 1) -- im2col, lane-dense (C, L) layout
# ----------------------------------------------------------------------------
def _conv_kernel(kf_ref, kt_ref, u0_ref, mask_ref, sigma_ref,
                 upad_ref, vpad_ref, pu_ref, pv_ref,
                 *, max_iter, L, Lp, W, KS, Cin_p, Cout_p, PADL):
    # kf_ref:   (Cout_p, 9*Cin_p)   forward taps  kf[co, k*Cin_p + ci] = K[co,ci,dy,dx]
    # kt_ref:   (Cin_p,  9*Cout_p)  adjoint taps  kt[ci, k*Cout_p + co] = K[co,ci,2-dy,2-dx]
    # u0_ref:   (Cin_p, Lp)         flattened feature map (Lp = round_up(H*W,128) on lanes)
    # mask_ref: (9, Lp)             per-tap validity masks (padding borders, row wrap, lane tail)
    # upad/vpad:(C, Lp + 2*PADL)    feature map with 128-aligned zero lane borders
    # pu/pv:    (9*C, Lp)           im2col patch matrices
    assert max_iter >= 1
    taps = KS * KS
    c = KS // 2
    skip_center = (L == Lp)   # center-column masks are no-ops only if no lane tail

    upad_ref[...] = jnp.zeros(upad_ref.shape, jnp.float32)
    vpad_ref[...] = jnp.zeros(vpad_ref.shape, jnp.float32)
    upad_ref[:, PADL:PADL + Lp] = u0_ref[...]   # interior (lane-aligned write)

    def build_patch(pad_ref, patch_ref, C):
        # 9 shifted-window copies -> one im2col patch matrix per conv;
        # tap-block rows are sublane-aligned (C multiple of 8), columns Lp-aligned.
        for k in range(taps):
            dy, dx = divmod(k, KS)
            start = PADL + (dy - c) * W + (dx - c)     # static lane offset
            window = pad_ref[:, start:start + Lp]
            if not (skip_center and dx == c):          # center column reads only zero border
                window = window * mask_ref[k:k + 1, :]
            patch_ref[k * C:(k + 1) * C, :] = window

    w_sq = u_sq = None
    for _ in range(max_iter):                          # static unroll
        # w = conv2d(pad(u), K) : one MXU matmul per conv
        build_patch(upad_ref, pu_ref, Cin_p)
        w = jnp.dot(kf_ref[...], pu_ref[...],
                    preferred_element_type=jnp.float32)          # (Cout_p, Lp)
        w_sq = jnp.sum(w * w, keepdims=True)                     # (1, 1)
        vpad_ref[:, PADL:PADL + Lp] = w

        # u_new = crop(conv_transpose2d(w, K))
        build_patch(vpad_ref, pv_ref, Cout_p)
        u_new = jnp.dot(kt_ref[...], pv_ref[...],
                        preferred_element_type=jnp.float32)      # (Cin_p, Lp)
        u_sq = jnp.sum(u_new * u_new, keepdims=True)             # (1, 1)
        upad_ref[:, PADL:PADL + Lp] = u_new * lax.rsqrt(u_sq + _EPS_SQ)

    # sigma = <conv(u_hat), v_hat> = ||K^T w|| / ||w||  (adjoint identity)
    sigma_ref[...] = jnp.sqrt(u_sq) * lax.rsqrt(w_sq + _EPS_SQ)


def _conv_sigma(K, u0, max_iter):
    assert max_iter >= 1, "power iteration needs max_iter >= 1"
    Cout, Cin, KS, KS2 = K.shape
    assert KS == 3 and KS2 == 3, "module hardcodes pad=(1,1,1,1), i.e. 3x3 kernels"
    B, Cin2, H, W = u0.shape
    assert B == 1 and Cin2 == Cin
    taps = KS * KS
    c = KS // 2
    L = H * W
    Lp = _round_up(L, 128)                 # lane-dense flattened spatial extent
    PADL = _round_up(c * (W + 1), 128)     # 128-aligned interior start (>= max |flat shift|)
    Cin_p = _round_up(Cin, 8)              # sublane-aligned tap blocks (f32)
    Cout_p = _round_up(Cout, 8)
    Lpad = Lp + 2 * PADL

    K32 = K.astype(jnp.float32)
    # Host-side parameter plumbing (pure pad/reshape/transpose/flip).
    kf = jnp.pad(K32.transpose(0, 2, 3, 1),
                 ((0, Cout_p - Cout), (0, 0), (0, 0), (0, Cin_p - Cin))
                 ).reshape(Cout_p, taps * Cin_p)
    kt = jnp.pad(jnp.flip(K32, axis=(2, 3)).transpose(1, 2, 3, 0),
                 ((0, Cin_p - Cin), (0, 0), (0, 0), (0, Cout_p - Cout))
                 ).reshape(Cin_p, taps * Cout_p)
    u_flat = jnp.pad(u0[0].reshape(Cin, L).astype(jnp.float32),
                     ((0, Cin_p - Cin), (0, Lp - L)))            # (Cin_p, Lp)

    # Per-tap validity masks: zero-padding borders, row-wrap contamination,
    # and the lane tail [L, Lp).
    yy = jnp.arange(H).reshape(H, 1)
    xx = jnp.arange(W).reshape(1, W)
    mask_rows = []
    for dy in range(KS):
        for dx in range(KS):
            valid = ((yy + dy - c >= 0) & (yy + dy - c < H) &
                     (xx + dx - c >= 0) & (xx + dx - c < W))
            mask_rows.append(jnp.pad(valid.reshape(-1).astype(jnp.float32),
                                     (0, Lp - L)))
    masks = jnp.stack(mask_rows)                                 # (taps, Lp)

    resident = 4 * (kf.size + kt.size + u_flat.size + masks.size
                    + Cin_p * Lpad + Cout_p * Lpad
                    + taps * Cin_p * Lp + taps * Cout_p * Lp)

    kernel = functools.partial(_conv_kernel, max_iter=int(max_iter),
                               L=L, Lp=Lp, W=W, KS=KS,
                               Cin_p=Cin_p, Cout_p=Cout_p, PADL=PADL)
    out = pl.pallas_call(
        kernel,
        out_shape=jax.ShapeDtypeStruct((1, 1), jnp.float32),
        in_specs=[pl.BlockSpec(memory_space=pltpu.MemorySpace.VMEM)
                  for _ in range(4)],
        out_specs=pl.BlockSpec(memory_space=pltpu.MemorySpace.VMEM),
        scratch_shapes=[pltpu.VMEM((Cin_p, Lpad), jnp.float32),           # pad(u)
                        pltpu.VMEM((Cout_p, Lpad), jnp.float32),          # pad(w)
                        pltpu.VMEM((taps * Cin_p, Lp), jnp.float32),      # patches(u)
                        pltpu.VMEM((taps * Cout_p, Lp), jnp.float32)],    # patches(w)
        compiler_params=pltpu.CompilerParams(
            vmem_limit_bytes=_vmem_limit_bytes(resident)),
    )(kf, kt, u_flat, masks)
    return out[0, 0]


def spectral_norm_power_method(M, u0, max_iter, compute_dtype=jnp.bfloat16):
    """forward(M, max_iter) of SpectralNormPowerMethod (u0 = the module's self.u).

    compute_dtype applies to the dense-path MXU operands (bf16 default, f32
    accumulate); pass jnp.float32 for bit-tighter parity with the f32 reference.
    """
    if M.ndim == 4:
        return _conv_sigma(M, u0, max_iter)
    elif M.ndim == 2:
        return _dense_sigma(M, u0, max_iter, compute_dtype=compute_dtype)
    raise ValueError("M must be rank 2 (dense) or rank 4 (conv kernel)")
    # TODO(synk): the PyTorch module's in-place `self.u.data = ...` side effect is
    # handled functionally (u0 in, not written back); return u_hat too if needed.


# ----------------------------------------------------------------------------
# Pure-JAX references (sanity check only; exact PyTorch-order semantics)
# ----------------------------------------------------------------------------
def _ref_dense(M, u, max_iter):
    v = None
    for _ in range(max_iter):
        v = M @ u
        v = v / (jnp.sqrt(jnp.sum(v * v)) + _EPS)
        u = M.T @ v
        u = u / (jnp.sqrt(jnp.sum(u * u)) + _EPS)
    z = M @ u
    return jnp.sum(z * v)


def _ref_conv(K, u, max_iter):
    pad = [(0, 0), (0, 0), (1, 1), (1, 1)]
    Kt = jnp.flip(K, axis=(2, 3)).transpose(1, 0, 2, 3)
    dn = ('NCHW', 'OIHW', 'NCHW')

    def c(x, k):
        return lax.conv_general_dilated(jnp.pad(x, pad), k, (1, 1), 'VALID',
                                        dimension_numbers=dn)
    v = None
    for _ in range(max_iter):
        v = c(u, K)
        v = v / (jnp.sqrt(jnp.sum(v * v)) + _EPS)
        u = c(v, Kt)   # == crop(conv_transpose2d(v, K)) for a 3x3 kernel
        u = u / (jnp.sqrt(jnp.sum(u * u)) + _EPS)
    z = c(u, K)
    return jnp.sum(z * v)


if __name__ == "__main__":
    key = jax.random.PRNGKey(0)
    k1, k2, k3, k4 = jax.random.split(key, 4)

    # ---- dense branch: M is (out=16, in=32); module input_size = 32 --------
    M = jax.random.normal(k1, (16, 32), jnp.float32)
    u_dense = jax.random.normal(k2, (32,), jnp.float32)
    u_dense = u_dense / jnp.linalg.norm(u_dense)          # __init__ normalization
    sigma_dense_bf16 = spectral_norm_power_method(M, u_dense, max_iter=10)   # bf16 default
    sigma_dense_f32 = spectral_norm_power_method(M, u_dense, max_iter=10,
                                                 compute_dtype=jnp.float32)

    # ---- conv branch: kernel (8, 4, 3, 3); module input_size = (1, 4, 8, 8)
    Kc = jax.random.normal(k3, (8, 4, 3, 3), jnp.float32)
    u_conv = jax.random.normal(k4, (1, 4, 8, 8), jnp.float32)
    u_conv = u_conv / jnp.linalg.norm(u_conv)
    sigma_conv = spectral_norm_power_method(Kc, u_conv, max_iter=5)

    jax.block_until_ready((sigma_dense_bf16, sigma_dense_f32, sigma_conv))

    ref_d = _ref_dense(M, u_dense, 10)
    ref_c = _ref_conv(Kc, u_conv, 5)
    assert jnp.allclose(sigma_dense_f32, ref_d, rtol=1e-3, atol=1e-3), (sigma_dense_f32, ref_d)
    assert jnp.allclose(sigma_dense_bf16, ref_d, rtol=5e-2, atol=5e-2), (sigma_dense_bf16, ref_d)
    assert jnp.allclose(sigma_conv, ref_c, rtol=1e-3, atol=1e-3), (sigma_conv, ref_c)

    print("KERNEL_OK")
</pallas_src>

<mosaic_0001>
module attributes {stable_mosaic.version = 11 : i64} {
  func.func @_dense_kernel(%arg0: memref<16x32xbf16, #tpu.memory_space<vmem>>, %arg1: memref<32x16xbf16, #tpu.memory_space<vmem>>, %arg2: memref<1x32xf32, #tpu.memory_space<vmem>>, %arg3: memref<1x1xf32, #tpu.memory_space<vmem>>) attributes {dimension_semantics = [], scalar_prefetch = 0 : i64, scratch_operands = 0 : i64, tpu.core_type = #tpu.core_type<tc>} {
    %c0 = arith.constant 0 : index
    %c0_0 = arith.constant 0 : index
    %0 = vector.load %arg2[%c0, %c0_0] : memref<1x32xf32, #tpu.memory_space<vmem>>, vector<1x32xf32>
    %1 = arith.truncf %0 : vector<1x32xf32> to vector<1x32xbf16>
    %c0_1 = arith.constant 0 : index
    %c0_2 = arith.constant 0 : index
    %2 = vector.load %arg1[%c0_1, %c0_2] : memref<32x16xbf16, #tpu.memory_space<vmem>>, vector<32x16xbf16>
    %cst = arith.constant dense<0.000000e+00> : vector<1x16xf32>
    %3 = tpu.matmul %1, %2, %cst {dimension_numbers = #tpu.dot_dimension_numbers<[1], [0], [0], [1], [0, 0, 1, 1], [], []>} : vector<1x32xbf16>, vector<32x16xbf16>, vector<1x16xf32> -> vector<1x16xf32>
    %4 = arith.truncf %3 : vector<1x16xf32> to vector<1x16xbf16>
    %c0_3 = arith.constant 0 : index
    %c0_4 = arith.constant 0 : index
    %5 = vector.load %arg0[%c0_3, %c0_4] : memref<16x32xbf16, #tpu.memory_space<vmem>>, vector<16x32xbf16>
    %cst_5 = arith.constant dense<0.000000e+00> : vector<1x32xf32>
    %6 = tpu.matmul %4, %5, %cst_5 {dimension_numbers = #tpu.dot_dimension_numbers<[1], [0], [0], [1], [0, 0, 1, 1], [], []>} : vector<1x16xbf16>, vector<16x32xbf16>, vector<1x32xf32> -> vector<1x32xf32>
    %7 = arith.mulf %6, %6 : vector<1x32xf32>
    %8 = vector.shape_cast %7 : vector<1x32xf32> to vector<1x1x32xf32>
    %cst_6 = arith.constant dense<0.000000e+00> : vector<1xf32>
    %9 = vector.multi_reduction <add>, %8, %cst_6 [1, 2] : vector<1x1x32xf32> to vector<1xf32>
    %10 = vector.shape_cast %9 : vector<1xf32> to vector<1x1x1xf32>
    %11 = vector.extract %10[0, 0, 0] : f32 from vector<1x1x1xf32>
    %12 = vector.broadcast %11 : f32 to vector<1x1xf32>
    %cst_7 = arith.constant 1.000000e-24 : f32
    %13 = vector.broadcast %cst_7 : f32 to vector<1x1xf32>
    %14 = arith.addf %12, %13 : vector<1x1xf32>
    %15 = math.rsqrt %14 : vector<1x1xf32>
    %16 = vector.broadcast %15 : vector<1x1xf32> to vector<1x32xf32>
    %17 = arith.mulf %6, %16 : vector<1x32xf32>
    %18 = arith.truncf %17 : vector<1x32xf32> to vector<1x32xbf16>
    %c0_8 = arith.constant 0 : index
    %c0_9 = arith.constant 0 : index
    %19 = vector.load %arg1[%c0_8, %c0_9] : memref<32x16xbf16, #tpu.memory_space<vmem>>, vector<32x16xbf16>
    %cst_10 = arith.constant dense<0.000000e+00> : vector<1x16xf32>
    %20 = tpu.matmul %18, %19, %cst_10 {dimension_numbers = #tpu.dot_dimension_numbers<[1], [0], [0], [1], [0, 0, 1, 1], [], []>} : vector<1x32xbf16>, vector<32x16xbf16>, vector<1x16xf32> -> vector<1x16xf32>
    %21 = arith.truncf %20 : vector<1x16xf32> to vector<1x16xbf16>
    %c0_11 = arith.constant 0 : index
    %c0_12 = arith.constant 0 : index
    %22 = vector.load %arg0[%c0_11, %c0_12] : memref<16x32xbf16, #tpu.memory_space<vmem>>, vector<16x32xbf16>
    %cst_13 = arith.constant dense<0.000000e+00> : vector<1x32xf32>
    %23 = tpu.matmul %21, %22, %cst_13 {dimension_numbers = #tpu.dot_dimension_numbers<[1], [0], [0], [1], [0, 0, 1, 1], [], []>} : vector<1x16xbf16>, vector<16x32xbf16>, vector<1x32xf32> -> vector<1x32xf32>
    %24 = arith.mulf %23, %23 : vector<1x32xf32>
    %25 = vector.shape_cast %24 : vector<1x32xf32> to vector<1x1x32xf32>
    %cst_14 = arith.constant dense<0.000000e+00> : vector<1xf32>
    %26 = vector.multi_reduction <add>, %25, %cst_14 [1, 2] : vector<1x1x32xf32> to vector<1xf32>
    %27 = vector.shape_cast %26 : vector<1xf32> to vector<1x1x1xf32>
    %28 = vector.extract %27[0, 0, 0] : f32 from vector<1x1x1xf32>
    %29 = vector.broadcast %28 : f32 to vector<1x1xf32>
    %cst_15 = arith.constant 1.000000e-24 : f32
    %30 = vector.broadcast %cst_15 : f32 to vector<1x1xf32>
    %31 = arith.addf %29, %30 : vector<1x1xf32>
    %32 = math.rsqrt %31 : vector<1x1xf32>
    %33 = vector.broadcast %32 : vector<1x1xf32> to vector<1x32xf32>
    %34 = arith.mulf %23, %33 : vector<1x32xf32>
    %35 = arith.truncf %34 : vector<1x32xf32> to vector<1x32xbf16>
    %c0_16 = arith.constant 0 : index
    %c0_17 = arith.constant 0 : index
    %36 = vector.load %arg1[%c0_16, %c0_17] : memref<32x16xbf16, #tpu.memory_space<vmem>>, vector<32x16xbf16>
    %cst_18 = arith.constant dense<0.000000e+00> : vector<1x16xf32>
    %37 = tpu.matmul %35, %36, %cst_18 {dimension_numbers = #tpu.dot_dimension_numbers<[1], [0], [0], [1], [0, 0, 1, 1], [], []>} : vector<1x32xbf16>, vector<32x16xbf16>, vector<1x16xf32> -> vector<1x16xf32>
    %38 = arith.truncf %37 : vector<1x16xf32> to vector<1x16xbf16>
    %c0_19 = arith.constant 0 : index
    %c0_20 = arith.constant 0 : index
    %39 = vector.load %arg0[%c0_19, %c0_20] : memref<16x32xbf16, #tpu.memory_space<vmem>>, vector<16x32xbf16>
    %cst_21 = arith.constant dense<0.000000e+00> : vector<1x32xf32>
    %40 = tpu.matmul %38, %39, %cst_21 {dimension_numbers = #tpu.dot_dimension_numbers<[1], [0], [0], [1], [0, 0, 1, 1], [], []>} : vector<1x16xbf16>, vector<16x32xbf16>, vector<1x32xf32> -> vector<1x32xf32>
    %41 = arith.mulf %40, %40 : vector<1x32xf32>
    %42 = vector.shape_cast %41 : vector<1x32xf32> to vector<1x1x32xf32>
    %cst_22 = arith.constant dense<0.000000e+00> : vector<1xf32>
    %43 = vector.multi_reduction <add>, %42, %cst_22 [1, 2] : vector<1x1x32xf32> to vector<1xf32>
    %44 = vector.shape_cast %43 : vector<1xf32> to vector<1x1x1xf32>
    %45 = vector.extract %44[0, 0, 0] : f32 from vector<1x1x1xf32>
    %46 = vector.broadcast %45 : f32 to vector<1x1xf32>
    %cst_23 = arith.constant 1.000000e-24 : f32
    %47 = vector.broadcast %cst_23 : f32 to vector<1x1xf32>
    %48 = arith.addf %46, %47 : vector<1x1xf32>
    %49 = math.rsqrt %48 : vector<1x1xf32>
    %50 = vector.broadcast %49 : vector<1x1xf32> to vector<1x32xf32>
    %51 = arith.mulf %40, %50 : vector<1x32xf32>
    %52 = arith.truncf %51 : vector<1x32xf32> to vector<1x32xbf16>
    %c0_24 = arith.constant 0 : index
    %c0_25 = arith.constant 0 : index
    %53 = vector.load %arg1[%c0_24, %c0_25] : memref<32x16xbf16, #tpu.memory_space<vmem>>, vector<32x16xbf16>
    %cst_26 = arith.constant dense<0.000000e+00> : vector<1x16xf32>
    %54 = tpu.matmul %52, %53, %cst_26 {dimension_numbers = #tpu.dot_dimension_numbers<[1], [0], [0], [1], [0, 0, 1, 1], [], []>} : vector<1x32xbf16>, vector<32x16xbf16>, vector<1x16xf32> -> vector<1x16xf32>
    %55 = arith.truncf %54 : vector<1x16xf32> to vector<1x16xbf16>
    %c0_27 = arith.constant 0 : index
    %c0_28 = arith.constant 0 : index
    %56 = vector.load %arg0[%c0_27, %c0_28] : memref<16x32xbf16, #tpu.memory_space<vmem>>, vector<16x32xbf16>
    %cst_29 = arith.constant dense<0.000000e+00> : vector<1x32xf32>
    %57 = tpu.matmul %55, %56, %cst_29 {dimension_numbers = #tpu.dot_dimension_numbers<[1], [0], [0], [1], [0, 0, 1, 1], [], []>} : vector<1x16xbf16>, vector<16x32xbf16>, vector<1x32xf32> -> vector<1x32xf32>
    %58 = arith.mulf %57, %57 : vector<1x32xf32>
    %59 = vector.shape_cast %58 : vector<1x32xf32> to vector<1x1x32xf32>
    %cst_30 = arith.constant dense<0.000000e+00> : vector<1xf32>
    %60 = vector.multi_reduction <add>, %59, %cst_30 [1, 2] : vector<1x1x32xf32> to vector<1xf32>
    %61 = vector.shape_cast %60 : vector<1xf32> to vector<1x1x1xf32>
    %62 = vector.extract %61[0, 0, 0] : f32 from vector<1x1x1xf32>
    %63 = vector.broadcast %62 : f32 to vector<1x1xf32>
    %cst_31 = arith.constant 1.000000e-24 : f32
    %64 = vector.broadcast %cst_31 : f32 to vector<1x1xf32>
    %65 = arith.addf %63, %64 : vector<1x1xf32>
    %66 = math.rsqrt %65 : vector<1x1xf32>
    %67 = vector.broadcast %66 : vector<1x1xf32> to vector<1x32xf32>
    %68 = arith.mulf %57, %67 : vector<1x32xf32>
    %69 = arith.truncf %68 : vector<1x32xf32> to vector<1x32xbf16>
    %c0_32 = arith.constant 0 : index
    %c0_33 = arith.constant 0 : index
    %70 = vector.load %arg1[%c0_32, %c0_33] : memref<32x16xbf16, #tpu.memory_space<vmem>>, vector<32x16xbf16>
    %cst_34 = arith.constant dense<0.000000e+00> : vector<1x16xf32>
    %71 = tpu.matmul %69, %70, %cst_34 {dimension_numbers = #tpu.dot_dimension_numbers<[1], [0], [0], [1], [0, 0, 1, 1], [], []>} : vector<1x32xbf16>, vector<32x16xbf16>, vector<1x16xf32> -> vector<1x16xf32>
    %72 = arith.truncf %71 : vector<1x16xf32> to vector<1x16xbf16>
    %c0_35 = arith.constant 0 : index
    %c0_36 = arith.constant 0 : index
    %73 = vector.load %arg0[%c0_35, %c0_36] : memref<16x32xbf16, #tpu.memory_space<vmem>>, vector<16x32xbf16>
    %cst_37 = arith.constant dense<0.000000e+00> : vector<1x32xf32>
    %74 = tpu.matmul %72, %73, %cst_37 {dimension_numbers = #tpu.dot_dimension_numbers<[1], [0], [0], [1], [0, 0, 1, 1], [], []>} : vector<1x16xbf16>, vector<16x32xbf16>, vector<1x32xf32> -> vector<1x32xf32>
    %75 = arith.mulf %74, %74 : vector<1x32xf32>
    %76 = vector.shape_cast %75 : vector<1x32xf32> to vector<1x1x32xf32>
    %cst_38 = arith.constant dense<0.000000e+00> : vector<1xf32>
    %77 = vector.multi_reduction <add>, %76, %cst_38 [1, 2] : vector<1x1x32xf32> to vector<1xf32>
    %78 = vector.shape_cast %77 : vector<1xf32> to vector<1x1x1xf32>
    %79 = vector.extract %78[0, 0, 0] : f32 from vector<1x1x1xf32>
    %80 = vector.broadcast %79 : f32 to vector<1x1xf32>
    %cst_39 = arith.constant 1.000000e-24 : f32
    %81 = vector.broadcast %cst_39 : f32 to vector<1x1xf32>
    %82 = arith.addf %80, %81 : vector<1x1xf32>
    %83 = math.rsqrt %82 : vector<1x1xf32>
    %84 = vector.broadcast %83 : vector<1x1xf32> to vector<1x32xf32>
    %85 = arith.mulf %74, %84 : vector<1x32xf32>
    %86 = arith.truncf %85 : vector<1x32xf32> to vector<1x32xbf16>
    %c0_40 = arith.constant 0 : index
    %c0_41 = arith.constant 0 : index
    %87 = vector.load %arg1[%c0_40, %c0_41] : memref<32x16xbf16, #tpu.memory_space<vmem>>, vector<32x16xbf16>
    %cst_42 = arith.constant dense<0.000000e+00> : vector<1x16xf32>
    %88 = tpu.matmul %86, %87, %cst_42 {dimension_numbers = #tpu.dot_dimension_numbers<[1], [0], [0], [1], [0, 0, 1, 1], [], []>} : vector<1x32xbf16>, vector<32x16xbf16>, vector<1x16xf32> -> vector<1x16xf32>
    %89 = arith.truncf %88 : vector<1x16xf32> to vector<1x16xbf16>
    %c0_43 = arith.constant 0 : index
    %c0_44 = arith.constant 0 : index
    %90 = vector.load %arg0[%c0_43, %c0_44] : memref<16x32xbf16, #tpu.memory_space<vmem>>, vector<16x32xbf16>
    %cst_45 = arith.constant dense<0.000000e+00> : vector<1x32xf32>
    %91 = tpu.matmul %89, %90, %cst_45 {dimension_numbers = #tpu.dot_dimension_numbers<[1], [0], [0], [1], [0, 0, 1, 1], [], []>} : vector<1x16xbf16>, vector<16x32xbf16>, vector<1x32xf32> -> vector<1x32xf32>
    %92 = arith.mulf %91, %91 : vector<1x32xf32>
    %93 = vector.shape_cast %92 : vector<1x32xf32> to vector<1x1x32xf32>
    %cst_46 = arith.constant dense<0.000000e+00> : vector<1xf32>
    %94 = vector.multi_reduction <add>, %93, %cst_46 [1, 2] : vector<1x1x32xf32> to vector<1xf32>
    %95 = vector.shape_cast %94 : vector<1xf32> to vector<1x1x1xf32>
    %96 = vector.extract %95[0, 0, 0] : f32 from vector<1x1x1xf32>
    %97 = vector.broadcast %96 : f32 to vector<1x1xf32>
    %cst_47 = arith.constant 1.000000e-24 : f32
    %98 = vector.broadcast %cst_47 : f32 to vector<1x1xf32>
    %99 = arith.addf %97, %98 : vector<1x1xf32>
    %100 = math.rsqrt %99 : vector<1x1xf32>
    %101 = vector.broadcast %100 : vector<1x1xf32> to vector<1x32xf32>
    %102 = arith.mulf %91, %101 : vector<1x32xf32>
    %103 = arith.truncf %102 : vector<1x32xf32> to vector<1x32xbf16>
    %c0_48 = arith.constant 0 : index
    %c0_49 = arith.constant 0 : index
    %104 = vector.load %arg1[%c0_48, %c0_49] : memref<32x16xbf16, #tpu.memory_space<vmem>>, vector<32x16xbf16>
    %cst_50 = arith.constant dense<0.000000e+00> : vector<1x16xf32>
    %105 = tpu.matmul %103, %104, %cst_50 {dimension_numbers = #tpu.dot_dimension_numbers<[1], [0], [0], [1], [0, 0, 1, 1], [], []>} : vector<1x32xbf16>, vector<32x16xbf16>, vector<1x16xf32> -> vector<1x16xf32>
    %106 = arith.truncf %105 : vector<1x16xf32> to vector<1x16xbf16>
    %c0_51 = arith.constant 0 : index
    %c0_52 = arith.constant 0 : index
    %107 = vector.load %arg0[%c0_51, %c0_52] : memref<16x32xbf16, #tpu.memory_space<vmem>>, vector<16x32xbf16>
    %cst_53 = arith.constant dense<0.000000e+00> : vector<1x32xf32>
    %108 = tpu.matmul %106, %107, %cst_53 {dimension_numbers = #tpu.dot_dimension_numbers<[1], [0], [0], [1], [0, 0, 1, 1], [], []>} : vector<1x16xbf16>, vector<16x32xbf16>, vector<1x32xf32> -> vector<1x32xf32>
    %109 = arith.mulf %108, %108 : vector<1x32xf32>
    %110 = vector.shape_cast %109 : vector<1x32xf32> to vector<1x1x32xf32>
    %cst_54 = arith.constant dense<0.000000e+00> : vector<1xf32>
    %111 = vector.multi_reduction <add>, %110, %cst_54 [1, 2] : vector<1x1x32xf32> to vector<1xf32>
    %112 = vector.shape_cast %111 : vector<1xf32> to vector<1x1x1xf32>
    %113 = vector.extract %112[0, 0, 0] : f32 from vector<1x1x1xf32>
    %114 = vector.broadcast %113 : f32 to vector<1x1xf32>
    %cst_55 = arith.constant 1.000000e-24 : f32
    %115 = vector.broadcast %cst_55 : f32 to vector<1x1xf32>
    %116 = arith.addf %114, %115 : vector<1x1xf32>
    %117 = math.rsqrt %116 : vector<1x1xf32>
    %118 = vector.broadcast %117 : vector<1x1xf32> to vector<1x32xf32>
    %119 = arith.mulf %108, %118 : vector<1x32xf32>
    %120 = arith.truncf %119 : vector<1x32xf32> to vector<1x32xbf16>
    %c0_56 = arith.constant 0 : index
    %c0_57 = arith.constant 0 : index
    %121 = vector.load %arg1[%c0_56, %c0_57] : memref<32x16xbf16, #tpu.memory_space<vmem>>, vector<32x16xbf16>
    %cst_58 = arith.constant dense<0.000000e+00> : vector<1x16xf32>
    %122 = tpu.matmul %120, %121, %cst_58 {dimension_numbers = #tpu.dot_dimension_numbers<[1], [0], [0], [1], [0, 0, 1, 1], [], []>} : vector<1x32xbf16>, vector<32x16xbf16>, vector<1x16xf32> -> vector<1x16xf32>
    %123 = arith.truncf %122 : vector<1x16xf32> to vector<1x16xbf16>
    %c0_59 = arith.constant 0 : index
    %c0_60 = arith.constant 0 : index
    %124 = vector.load %arg0[%c0_59, %c0_60] : memref<16x32xbf16, #tpu.memory_space<vmem>>, vector<16x32xbf16>
    %cst_61 = arith.constant dense<0.000000e+00> : vector<1x32xf32>
    %125 = tpu.matmul %123, %124, %cst_61 {dimension_numbers = #tpu.dot_dimension_numbers<[1], [0], [0], [1], [0, 0, 1, 1], [], []>} : vector<1x16xbf16>, vector<16x32xbf16>, vector<1x32xf32> -> vector<1x32xf32>
    %126 = arith.mulf %125, %125 : vector<1x32xf32>
    %127 = vector.shape_cast %126 : vector<1x32xf32> to vector<1x1x32xf32>
    %cst_62 = arith.constant dense<0.000000e+00> : vector<1xf32>
    %128 = vector.multi_reduction <add>, %127, %cst_62 [1, 2] : vector<1x1x32xf32> to vector<1xf32>
    %129 = vector.shape_cast %128 : vector<1xf32> to vector<1x1x1xf32>
    %130 = vector.extract %129[0, 0, 0] : f32 from vector<1x1x1xf32>
    %131 = vector.broadcast %130 : f32 to vector<1x1xf32>
    %cst_63 = arith.constant 1.000000e-24 : f32
    %132 = vector.broadcast %cst_63 : f32 to vector<1x1xf32>
    %133 = arith.addf %131, %132 : vector<1x1xf32>
    %134 = math.rsqrt %133 : vector<1x1xf32>
    %135 = vector.broadcast %134 : vector<1x1xf32> to vector<1x32xf32>
    %136 = arith.mulf %125, %135 : vector<1x32xf32>
    %137 = arith.truncf %136 : vector<1x32xf32> to vector<1x32xbf16>
    %c0_64 = arith.constant 0 : index
    %c0_65 = arith.constant 0 : index
    %138 = vector.load %arg1[%c0_64, %c0_65] : memref<32x16xbf16, #tpu.memory_space<vmem>>, vector<32x16xbf16>
    %cst_66 = arith.constant dense<0.000000e+00> : vector<1x16xf32>
    %139 = tpu.matmul %137, %138, %cst_66 {dimension_numbers = #tpu.dot_dimension_numbers<[1], [0], [0], [1], [0, 0, 1, 1], [], []>} : vector<1x32xbf16>, vector<32x16xbf16>, vector<1x16xf32> -> vector<1x16xf32>
    %140 = arith.truncf %139 : vector<1x16xf32> to vector<1x16xbf16>
    %c0_67 = arith.constant 0 : index
    %c0_68 = arith.constant 0 : index
    %141 = vector.load %arg0[%c0_67, %c0_68] : memref<16x32xbf16, #tpu.memory_space<vmem>>, vector<16x32xbf16>
    %cst_69 = arith.constant dense<0.000000e+00> : vector<1x32xf32>
    %142 = tpu.matmul %140, %141, %cst_69 {dimension_numbers = #tpu.dot_dimension_numbers<[1], [0], [0], [1], [0, 0, 1, 1], [], []>} : vector<1x16xbf16>, vector<16x32xbf16>, vector<1x32xf32> -> vector<1x32xf32>
    %143 = arith.mulf %142, %142 : vector<1x32xf32>
    %144 = vector.shape_cast %143 : vector<1x32xf32> to vector<1x1x32xf32>
    %cst_70 = arith.constant dense<0.000000e+00> : vector<1xf32>
    %145 = vector.multi_reduction <add>, %144, %cst_70 [1, 2] : vector<1x1x32xf32> to vector<1xf32>
    %146 = vector.shape_cast %145 : vector<1xf32> to vector<1x1x1xf32>
    %147 = vector.extract %146[0, 0, 0] : f32 from vector<1x1x1xf32>
    %148 = vector.broadcast %147 : f32 to vector<1x1xf32>
    %cst_71 = arith.constant 1.000000e-24 : f32
    %149 = vector.broadcast %cst_71 : f32 to vector<1x1xf32>
    %150 = arith.addf %148, %149 : vector<1x1xf32>
    %151 = math.rsqrt %150 : vector<1x1xf32>
    %152 = vector.broadcast %151 : vector<1x1xf32> to vector<1x32xf32>
    %153 = arith.mulf %142, %152 : vector<1x32xf32>
    %154 = arith.truncf %153 : vector<1x32xf32> to vector<1x32xbf16>
    %c0_72 = arith.constant 0 : index
    %c0_73 = arith.constant 0 : index
    %155 = vector.load %arg1[%c0_72, %c0_73] : memref<32x16xbf16, #tpu.memory_space<vmem>>, vector<32x16xbf16>
    %cst_74 = arith.constant dense<0.000000e+00> : vector<1x16xf32>
    %156 = tpu.matmul %154, %155, %cst_74 {dimension_numbers = #tpu.dot_dimension_numbers<[1], [0], [0], [1], [0, 0, 1, 1], [], []>} : vector<1x32xbf16>, vector<32x16xbf16>, vector<1x16xf32> -> vector<1x16xf32>
    %157 = arith.mulf %156, %156 : vector<1x16xf32>
    %158 = vector.shape_cast %157 : vector<1x16xf32> to vector<1x1x16xf32>
    %cst_75 = arith.constant dense<0.000000e+00> : vector<1xf32>
    %159 = vector.multi_reduction <add>, %158, %cst_75 [1, 2] : vector<1x1x16xf32> to vector<1xf32>
    %160 = vector.shape_cast %159 : vector<1xf32> to vector<1x1x1xf32>
    %161 = vector.extract %160[0, 0, 0] : f32 from vector<1x1x1xf32>
    %162 = vector.broadcast %161 : f32 to vector<1x1xf32>
    %163 = arith.truncf %156 : vector<1x16xf32> to vector<1x16xbf16>
    %c0_76 = arith.constant 0 : index
    %c0_77 = arith.constant 0 : index
    %164 = vector.load %arg0[%c0_76, %c0_77] : memref<16x32xbf16, #tpu.memory_space<vmem>>, vector<16x32xbf16>
    %cst_78 = arith.constant dense<0.000000e+00> : vector<1x32xf32>
    %165 = tpu.matmul %163, %164, %cst_78 {dimension_numbers = #tpu.dot_dimension_numbers<[1], [0], [0], [1], [0, 0, 1, 1], [], []>} : vector<1x16xbf16>, vector<16x32xbf16>, vector<1x32xf32> -> vector<1x32xf32>
    %166 = arith.mulf %165, %165 : vector<1x32xf32>
    %167 = vector.shape_cast %166 : vector<1x32xf32> to vector<1x1x32xf32>
    %cst_79 = arith.constant dense<0.000000e+00> : vector<1xf32>
    %168 = vector.multi_reduction <add>, %167, %cst_79 [1, 2] : vector<1x1x32xf32> to vector<1xf32>
    %169 = vector.shape_cast %168 : vector<1xf32> to vector<1x1x1xf32>
    %170 = vector.extract %169[0, 0, 0] : f32 from vector<1x1x1xf32>
    %171 = vector.broadcast %170 : f32 to vector<1x1xf32>
    %172 = math.sqrt %171 : vector<1x1xf32>
    %cst_80 = arith.constant 1.000000e-24 : f32
    %173 = vector.broadcast %cst_80 : f32 to vector<1x1xf32>
    %174 = arith.addf %162, %173 : vector<1x1xf32>
    %175 = math.rsqrt %174 : vector<1x1xf32>
    %176 = arith.mulf %172, %175 : vector<1x1xf32>
    %c0_81 = arith.constant 0 : index
    %c0_82 = arith.constant 0 : index
    %177 = vector.load %arg3[%c0_81, %c0_82] : memref<1x1xf32, #tpu.memory_space<vmem>>, vector<1x1xf32>
    tpu.vector_store %arg3[%c0_81, %c0_82], %176 {strides = array<i32>} : memref<1x1xf32, #tpu.memory_space<vmem>>, vector<1x1xf32>,
    return
  }
}

</mosaic_0001>

<llo_original>
// kernel: tpu_custom_call.1
$region0: #{tpu_custom_call.1}
  #allocation0 [shape = 'u32[]', space=smem, size = 0x4, offset = 0x4, fixed_abs, tag = 'smem constant byte address 0x4 - core index']
  #allocation1 [shape = 'u32[144,128]{1,0:T(1,128)}', space=vmem, size = 0x12000, scoped, tag = 'internal scratch']
  %s0 = inlined_call_operand.vmem [shape: bf16[16,32], index: 0, kind: input, shape index: {}]
  %s1 = inlined_call_operand.vmem [shape: bf16[32,16], index: 1, kind: input, shape index: {}]
  %s2 = inlined_call_operand.vmem [shape: f32[1,32], index: 2, kind: input, shape index: {}]
  %s3 = inlined_call_operand.hbm [shape: f32[1,1], index: 3, kind: output, shape index: {}]
  %s4 = sld [smem:[#allocation0]]
  $region22: #{tpu_custom_call.1} parent=0
    _
  %s6 = ssub.s32 1, %s4
  %s7 = scalar_select 0, %s6, %s4
  $region1: #{tpu_custom_call.1} parent=0
    #allocation2 [shape = 'u8[512]{0}', space=vmem, size = 0x400, scoped, tag = 'output window, operand 0, single buffered']
    #allocation3 [shape = 's32[1]{0}', space=sflag, size = 0x4, scoped, tag = 'scoped memory for tpu_custom_call.1']
    %8 = vsyncpa [#allocation3], 0
    // Predicated region
    $region2: #{tpu_custom_call.1} parent=1 // pred_check
      _
    $region3: #{tpu_custom_call.1} parent=1 // pred_check_branch
      %10 = sbr.rel (0) target = $region5
    $region4: #{tpu_custom_call.1} parent=1 // pred_region
      _
    $region5: #{tpu_custom_call.1} parent=1 // pred_fallthru
      _
    // Predicated region
    $region6: #{tpu_custom_call.1} parent=1 // pred_check
      _
    $region7: #{tpu_custom_call.1} parent=1 // pred_check_branch
      %12 = sbr.rel (0) target = $region9
    $region8: #{tpu_custom_call.1} parent=1 // pred_region
      _
    $region9: #{tpu_custom_call.1} parent=1 // pred_fallthru
      _
    // Predicated region
    $region10: #{tpu_custom_call.1} parent=1 // pred_check
      _
    $region11: #{tpu_custom_call.1} parent=1 // pred_check_branch
      %14 = sbr.rel (0) target = $region13
    $region12: #{tpu_custom_call.1} parent=1 // pred_region
      _
    $region13: #{tpu_custom_call.1} parent=1 // pred_fallthru
      _
    %v16 = vld [vmem:[%s2] sm:$0x1]
    %v17 = vpack.c.bf16 %v16, %v16
    %v18 = vld [vmem:[%s1] sm:$0xf]
    %v19 = vld [vmem:[%s1 + $0x4] sm:$0xf]
    %v20 = vld [vmem:[%s1 + $0x8] sm:$0xf]
    %v21 = vld [vmem:[%s1 + $0xc] sm:$0xf]
    %v26 = vunpack.c.l.b16 %v18
    %v27 = vunpack.c.l.b16 %v19
    %v28 = vunpack.c.l.b16 %v20
    %v29 = vunpack.c.l.b16 %v21
    %v30 = vpack.c.b16 %v27, %v26
    %v31 = vpack.c.b16 %v29, %v28
    %vm34 = vcmask 261120
    %v36 = vsel %vm34, %v17, 0
    %38 = vmatprep.subr.bf16.mxu0 0
    %39 = vmatpush1.bf16.msra.mxu0 %v30
    %40 = vmatprep.subr.bf16.mxu0 0
    %41 = vmatpush1.bf16.msra.mxu0 %v31
    %42 = vmatprep.subr.bf16.mxu0 0
    %43 = vmatpush1.bf16.msra.mxu0 0
    %44 = vmatprep.subr.bf16.mxu0 0
    %45 = vmatpush1.bf16.msra.mxu0 0
    %46 = vmatprep.subr.bf16.mxu0 0
    %47 = vmatpush1.bf16.msra.mxu0 0
    %48 = vmatprep.subr.bf16.mxu0 0
    %49 = vmatpush1.bf16.msra.mxu0 0
    %50 = vmatprep.subr.bf16.mxu0 0
    %51 = vmatpush1.bf16.msra.mxu0 0
    %52 = vmatprep.subr.bf16.mxu0 0
    %53 = vmatpush1.bf16.msra.mxu0 0
    %54 = vmatprep.subr.bf16.mxu0 0
    %55 = vmatpush1.bf16.msra.mxu0 0
    %56 = vmatprep.subr.bf16.mxu0 0
    %57 = vmatpush1.bf16.msra.mxu0 0
    %58 = vmatprep.subr.bf16.mxu0 0
    %59 = vmatpush1.bf16.msra.mxu0 0
    %60 = vmatprep.subr.bf16.mxu0 0
    %61 = vmatpush1.bf16.msra.mxu0 0
    %62 = vmatprep.subr.bf16.mxu0 0
    %63 = vmatpush1.bf16.msra.mxu0 0
    %64 = vmatprep.subr.bf16.mxu0 0
    %65 = vmatpush1.bf16.msra.mxu0 0
    %66 = vmatprep.subr.bf16.mxu0 0
    %67 = vmatpush1.bf16.msra.mxu0 0
    %68 = vmatprep.subr.bf16.mxu0 0
    %69 = vmatpush1.bf16.msra.mxu0 0
    %70 = vmatprep.mubr.bf16.mxu0 0
    %71 = vmatmul.mubr.bf16.gmra.mrb[0].mxu0 %v36
    %v72 = vpop.f32.mrb[0].mxu0
    %v73 = vadd.f32 0.0, %v72
    %v74 = vpop.f32.mrb[0].mxu0
    %v75 = vpop.f32.mrb[0].mxu0
    %v76 = vpop.f32.mrb[0].mxu0
    %77 = vdwg.mxu0
    %v78 = vpack.c.bf16 %v73, %v73
    %v79 = vld [vmem:[%s0] sm:$0xf]
    %v80 = vld [vmem:[%s0 + $0x4] sm:$0xf]
    %v83 = vunpack.c.l.b16 %v79
    %v84 = vunpack.c.l.b16 %v80
    %v85 = vpack.c.b16 %v84, %v83
    %vm87 = vcmask 130048
    %v89 = vsel %vm87, %v78, 0
    %91 = vmatprep.subr.bf16.mxu0 0
    %92 = vmatpush1.bf16.msra.mxu0 %v85
    %93 = vmatprep.subr.bf16.mxu0 0
    %94 = vmatpush1.bf16.msra.mxu0 0
    %95 = vmatprep.subr.bf16.mxu0 0
    %96 = vmatpush1.bf16.msra.mxu0 0
    %97 = vmatprep.subr.bf16.mxu0 0
    %98 = vmatpush1.bf16.msra.mxu0 0
    %99 = vmatprep.subr.bf16.mxu0 0
    %100 = vmatpush1.bf16.msra.mxu0 0
    %101 = vmatprep.subr.bf16.mxu0 0
    %102 = vmatpush1.bf16.msra.mxu0 0
    %103 = vmatprep.subr.bf16.mxu0 0
    %104 = vmatpush1.bf16.msra.mxu0 0
    %105 = vmatprep.subr.bf16.mxu0 0
    %106 = vmatpush1.bf16.msra.mxu0 0
    %107 = vmatprep.subr.bf16.mxu0 0
    %108 = vmatpush1.bf16.msra.mxu0 0
    %109 = vmatprep.subr.bf16.mxu0 0
    %110 = vmatpush1.bf16.msra.mxu0 0
    %111 = vmatprep.subr.bf16.mxu0 0
    %112 = vmatpush1.bf16.msra.mxu0 0
    %113 = vmatprep.subr.bf16.mxu0 0
    %114 = vmatpush1.bf16.msra.mxu0 0
    %115 = vmatprep.subr.bf16.mxu0 0
    %116 = vmatpush1.bf16.msra.mxu0 0
    %117 = vmatprep.subr.bf16.mxu0 0
    %118 = vmatpush1.bf16.msra.mxu0 0
    %119 = vmatprep.subr.bf16.mxu0 0
    %120 = vmatpush1.bf16.msra.mxu0 0
    %121 = vmatprep.subr.bf16.mxu0 0
    %122 = vmatpush1.bf16.msra.mxu0 0
    %123 = vmatprep.mubr.bf16.mxu0 0
    %124 = vmatmul.mubr.bf16.gmra.mrb[0].mxu0 %v89
    %v125 = vpop.f32.mrb[0].mxu0
    %v126 = vadd.f32 0.0, %v125
    %v127 = vpop.f32.mrb[0].mxu0
    %v128 = vpop.f32.mrb[0].mxu0
    %v129 = vpop.f32.mrb[0].mxu0
    %130 = vdwg.mxu0
    %v131 = vmul.f32 %v126, %v126
    %vm132 = vcmask 253952
    %v133 = vsel %vm132, %v131, 0.0
    %134 = vadd.xlane.f32.xlu0 %v133
    %v135 = vpop.xlane.xlu0 %134
    %v136 = vrot.slane %v135, 4
    %v137 = vadd.f32 %v135, %v136
    %v138 = vrot.slane %v137, 2
    %v139 = vadd.f32 %v137, %v138
    %v140 = vrot.slane %v139, 1
    %v141 = vadd.f32 %v139, %v140
    %s142 = vtos %v141
    %v143 = vstv %s142
    %v144 = vadd.f32 %v143, 1e-24
    %v145 = vrsqrt.pop %v144
    %v146 = vmul.f32 %v126, %v145
    %v147 = vpack.c.bf16 %v146, %v146
    %v149 = vsel %vm34, %v147, 0
    %151 = vmatprep.subr.bf16.mxu0 0
    %152 = vmatpush1.bf16.msra.mxu0 %v30
    %153 = vmatprep.subr.bf16.mxu0 0
    %154 = vmatpush1.bf16.msra.mxu0 %v31
    %155 = vmatprep.subr.bf16.mxu0 0
    %156 = vmatpush1.bf16.msra.mxu0 0
    %157 = vmatprep.subr.bf16.mxu0 0
    %158 = vmatpush1.bf16.msra.mxu0 0
    %159 = vmatprep.subr.bf16.mxu0 0
    %160 = vmatpush1.bf16.msra.mxu0 0
    %161 = vmatprep.subr.bf16.mxu0 0
    %162 = vmatpush1.bf16.msra.mxu0 0
    %163 = vmatprep.subr.bf16.mxu0 0
    %164 = vmatpush1.bf16.msra.mxu0 0
    %165 = vmatprep.subr.bf16.mxu0 0
    %166 = vmatpush1.bf16.msra.mxu0 0
    %167 = vmatprep.subr.bf16.mxu0 0
    %168 = vmatpush1.bf16.msra.mxu0 0
    %169 = vmatprep.subr.bf16.mxu0 0
    %170 = vmatpush1.bf16.msra.mxu0 0
    %171 = vmatprep.subr.bf16.mxu0 0
    %172 = vmatpush1.bf16.msra.mxu0 0
    %173 = vmatprep.subr.bf16.mxu0 0
    %174 = vmatpush1.bf16.msra.mxu0 0
    %175 = vmatprep.subr.bf16.mxu0 0
    %176 = vmatpush1.bf16.msra.mxu0 0
    %177 = vmatprep.subr.bf16.mxu0 0
    %178 = vmatpush1.bf16.msra.mxu0 0
    %179 = vmatprep.subr.bf16.mxu0 0
    %180 = vmatpush1.bf16.msra.mxu0 0
    %181 = vmatprep.subr.bf16.mxu0 0
    %182 = vmatpush1.bf16.msra.mxu0 0
    %183 = vmatprep.mubr.bf16.mxu0 0
    %184 = vmatmul.mubr.bf16.gmra.mrb[0].mxu0 %v149
    %v185 = vpop.f32.mrb[0].mxu0
    %v186 = vadd.f32 0.0, %v185
    %v187 = vpop.f32.mrb[0].mxu0
    %v188 = vpop.f32.mrb[0].mxu0
    %v189 = vpop.f32.mrb[0].mxu0
    %190 = vdwg.mxu0
    %v191 = vpack.c.bf16 %v186, %v186
    %v193 = vsel %vm87, %v191, 0
    %195 = vmatprep.subr.bf16.mxu0 0
    %196 = vmatpush1.bf16.msra.mxu0 %v85
    %197 = vmatprep.subr.bf16.mxu0 0
    %198 = vmatpush1.bf16.msra.mxu0 0
    %199 = vmatprep.subr.bf16.mxu0 0
    %200 = vmatpush1.bf16.msra.mxu0 0
    %201 = vmatprep.subr.bf16.mxu0 0
    %202 = vmatpush1.bf16.msra.mxu0 0
    %203 = vmatprep.subr.bf16.mxu0 0
    %204 = vmatpush1.bf16.msra.mxu0 0
    %205 = vmatprep.subr.bf16.mxu0 0
    %206 = vmatpush1.bf16.msra.mxu0 0
    %207 = vmatprep.subr.bf16.mxu0 0
    %208 = vmatpush1.bf16.msra.mxu0 0
    %209 = vmatprep.subr.bf16.mxu0 0
    %210 = vmatpush1.bf16.msra.mxu0 0
    %211 = vmatprep.subr.bf16.mxu0 0
    %212 = vmatpush1.bf16.msra.mxu0 0
    %213 = vmatprep.subr.bf16.mxu0 0
    %214 = vmatpush1.bf16.msra.mxu0 0
    %215 = vmatprep.subr.bf16.mxu0 0
    %216 = vmatpush1.bf16.msra.mxu0 0
    %217 = vmatprep.subr.bf16.mxu0 0
    %218 = vmatpush1.bf16.msra.mxu0 0
    %219 = vmatprep.subr.bf16.mxu0 0
    %220 = vmatpush1.bf16.msra.mxu0 0
    %221 = vmatprep.subr.bf16.mxu0 0
    %222 = vmatpush1.bf16.msra.mxu0 0
    %223 = vmatprep.subr.bf16.mxu0 0
    %224 = vmatpush1.bf16.msra.mxu0 0
    %225 = vmatprep.subr.bf16.mxu0 0
    %226 = vmatpush1.bf16.msra.mxu0 0
    %227 = vmatprep.mubr.bf16.mxu0 0
    %228 = vmatmul.mubr.bf16.gmra.mrb[0].mxu0 %v193
    %v229 = vpop.f32.mrb[0].mxu0
    %v230 = vadd.f32 0.0, %v229
    %v231 = vpop.f32.mrb[0].mxu0
    %v232 = vpop.f32.mrb[0].mxu0
    %v233 = vpop.f32.mrb[0].mxu0
    %234 = vdwg.mxu0
    %v235 = vmul.f32 %v230, %v230
    %v236 = vsel %vm132, %v235, 0.0
    %237 = vadd.xlane.f32.xlu0 %v236
    %v238 = vpop.xlane.xlu0 %237
    %v239 = vrot.slane %v238, 4
    %v240 = vadd.f32 %v238, %v239
    %v241 = vrot.slane %v240, 2
    %v242 = vadd.f32 %v240, %v241
    %v243 = vrot.slane %v242, 1
    %v244 = vadd.f32 %v242, %v243
    %s245 = vtos %v244
    %v246 = vstv %s245
    %v247 = vadd.f32 %v246, 1e-24
    %v248 = vrsqrt.pop %v247
    %v249 = vmul.f32 %v230, %v248
    %v250 = vpack.c.bf16 %v249, %v249
    %v252 = vsel %vm34, %v250, 0
    %254 = vmatprep.subr.bf16.mxu0 0
    %255 = vmatpush1.bf16.msra.mxu0 %v30
    %256 = vmatprep.subr.bf16.mxu0 0
    %257 = vmatpush1.bf16.msra.mxu0 %v31
    %258 = vmatprep.subr.bf16.mxu0 0
    %259 = vmatpush1.bf16.msra.mxu0 0
    %260 = vmatprep.subr.bf16.mxu0 0
    %261 = vmatpush1.bf16.msra.mxu0 0
    %262 = vmatprep.subr.bf16.mxu0 0
    %263 = vmatpush1.bf16.msra.mxu0 0
    %264 = vmatprep.subr.bf16.mxu0 0
    %265 = vmatpush1.bf16.msra.mxu0 0
    %266 = vmatprep.subr.bf16.mxu0 0
    %267 = vmatpush1.bf16.msra.mxu0 0
    %268 = vmatprep.subr.bf16.mxu0 0
    %269 = vmatpush1.bf16.msra.mxu0 0
    %270 = vmatprep.subr.bf16.mxu0 0
    %271 = vmatpush1.bf16.msra.mxu0 0
    %272 = vmatprep.subr.bf16.mxu0 0
    %273 = vmatpush1.bf16.msra.mxu0 0
    %274 = vmatprep.subr.bf16.mxu0 0
    %275 = vmatpush1.bf16.msra.mxu0 0
    %276 = vmatprep.subr.bf16.mxu0 0
    %277 = vmatpush1.bf16.msra.mxu0 0
    %278 = vmatprep.subr.bf16.mxu0 0
    %279 = vmatpush1.bf16.msra.mxu0 0
    %280 = vmatprep.subr.bf16.mxu0 0
    %281 = vmatpush1.bf16.msra.mxu0 0
    %282 = vmatprep.subr.bf16.mxu0 0
    %283 = vmatpush1.bf16.msra.mxu0 0
    %284 = vmatprep.subr.bf16.mxu0 0
    %285 = vmatpush1.bf16.msra.mxu0 0
    %286 = vmatprep.mubr.bf16.mxu0 0
    %287 = vmatmul.mubr.bf16.gmra.mrb[0].mxu0 %v252
    %v288 = vpop.f32.mrb[0].mxu0
    %v289 = vadd.f32 0.0, %v288
    %v290 = vpop.f32.mrb[0].mxu0
    %v291 = vpop.f32.mrb[0].mxu0
    %v292 = vpop.f32.mrb[0].mxu0
    %293 = vdwg.mxu0
    %v294 = vpack.c.bf16 %v289, %v289
    %v296 = vsel %vm87, %v294, 0
    %298 = vmatprep.subr.bf16.mxu0 0
    %299 = vmatpush1.bf16.msra.mxu0 %v85
    %300 = vmatprep.subr.bf16.mxu0 0
    %301 = vmatpush1.bf16.msra.mxu0 0
    %302 = vmatprep.subr.bf16.mxu0 0
    %303 = vmatpush1.bf16.msra.mxu0 0
    %304 = vmatprep.subr.bf16.mxu0 0
    %305 = vmatpush1.bf16.msra.mxu0 0
    %306 = vmatprep.subr.bf16.mxu0 0
    %307 = vmatpush1.bf16.msra.mxu0 0
    %308 = vmatprep.subr.bf16.mxu0 0
    %309 = vmatpush1.bf16.msra.mxu0 0
    %310 = vmatprep.subr.bf16.mxu0 0
    %311 = vmatpush1.bf16.msra.mxu0 0
    %312 = vmatprep.subr.bf16.mxu0 0
    %313 = vmatpush1.bf16.msra.mxu0 0
    %314 = vmatprep.subr.bf16.mxu0 0
    %315 = vmatpush1.bf16.msra.mxu0 0
    %316 = vmatprep.subr.bf16.mxu0 0
    %317 = vmatpush1.bf16.msra.mxu0 0
    %318 = vmatprep.subr.bf16.mxu0 0
    %319 = vmatpush1.bf16.msra.mxu0 0
    %320 = vmatprep.subr.bf16.mxu0 0
    %321 = vmatpush1.bf16.msra.mxu0 0
    %322 = vmatprep.subr.bf16.mxu0 0
    %323 = vmatpush1.bf16.msra.mxu0 0
    %324 = vmatprep.subr.bf16.mxu0 0
    %325 = vmatpush1.bf16.msra.mxu0 0
    %326 = vmatprep.subr.bf16.mxu0 0
    %327 = vmatpush1.bf16.msra.mxu0 0
    %328 = vmatprep.subr.bf16.mxu0 0
    %329 = vmatpush1.bf16.msra.mxu0 0
    %330 = vmatprep.mubr.bf16.mxu0 0
    %331 = vmatmul.mubr.bf16.gmra.mrb[0].mxu0 %v296
    %v332 = vpop.f32.mrb[0].mxu0
    %v333 = vadd.f32 0.0, %v332
    %v334 = vpop.f32.mrb[0].mxu0
    %v335 = vpop.f32.mrb[0].mxu0
    %v336 = vpop.f32.mrb[0].mxu0
    %337 = vdwg.mxu0
    %v338 = vmul.f32 %v333, %v333
    %v339 = vsel %vm132, %v338, 0.0
    %340 = vadd.xlane.f32.xlu0 %v339
    %v341 = vpop.xlane.xlu0 %340
    %v342 = vrot.slane %v341, 4
    %v343 = vadd.f32 %v341, %v342
    %v344 = vrot.slane %v343, 2
    %v345 = vadd.f32 %v343, %v344
    %v346 = vrot.slane %v345, 1
    %v347 = vadd.f32 %v345, %v346
    %s348 = vtos %v347
    %v349 = vstv %s348
    %v350 = vadd.f32 %v349, 1e-24
    %v351 = vrsqrt.pop %v350
    %v352 = vmul.f32 %v333, %v351
    %v353 = vpack.c.bf16 %v352, %v352
    %v355 = vsel %vm34, %v353, 0
    %357 = vmatprep.subr.bf16.mxu0 0
    %358 = vmatpush1.bf16.msra.mxu0 %v30
    %359 = vmatprep.subr.bf16.mxu0 0
    %360 = vmatpush1.bf16.msra.mxu0 %v31
    %361 = vmatprep.subr.bf16.mxu0 0
    %362 = vmatpush1.bf16.msra.mxu0 0
    %363 = vmatprep.subr.bf16.mxu0 0
    %364 = vmatpush1.bf16.msra.mxu0 0
    %365 = vmatprep.subr.bf16.mxu0 0
    %366 = vmatpush1.bf16.msra.mxu0 0
    %367 = vmatprep.subr.bf16.mxu0 0
    %368 = vmatpush1.bf16.msra.mxu0 0
    %369 = vmatprep.subr.bf16.mxu0 0
    %370 = vmatpush1.bf16.msra.mxu0 0
    %371 = vmatprep.subr.bf16.mxu0 0
    %372 = vmatpush1.bf16.msra.mxu0 0
    %373 = vmatprep.subr.bf16.mxu0 0
    %374 = vmatpush1.bf16.msra.mxu0 0
    %375 = vmatprep.subr.bf16.mxu0 0
    %376 = vmatpush1.bf16.msra.mxu0 0
    %377 = vmatprep.subr.bf16.mxu0 0
    %378 = vmatpush1.bf16.msra.mxu0 0
    %379 = vmatprep.subr.bf16.mxu0 0
    %380 = vmatpush1.bf16.msra.mxu0 0
    %381 = vmatprep.subr.bf16.mxu0 0
    %382 = vmatpush1.bf16.msra.mxu0 0
    %383 = vmatprep.subr.bf16.mxu0 0
    %384 = vmatpush1.bf16.msra.mxu0 0
    %385 = vmatprep.subr.bf16.mxu0 0
    %386 = vmatpush1.bf16.msra.mxu0 0
    %387 = vmatprep.subr.bf16.mxu0 0
    %388 = vmatpush1.bf16.msra.mxu0 0
    %389 = vmatprep.mubr.bf16.mxu0 0
    %390 = vmatmul.mubr.bf16.gmra.mrb[0].mxu0 %v355
    %v391 = vpop.f32.mrb[0].mxu0
    %v392 = vadd.f32 0.0, %v391
    %v393 = vpop.f32.mrb[0].mxu0
    %v394 = vpop.f32.mrb[0].mxu0
    %v395 = vpop.f32.mrb[0].mxu0
    %396 = vdwg.mxu0
    %v397 = vpack.c.bf16 %v392, %v392
    %v399 = vsel %vm87, %v397, 0
    %401 = vmatprep.subr.bf16.mxu0 0
    %402 = vmatpush1.bf16.msra.mxu0 %v85
    %403 = vmatprep.subr.bf16.mxu0 0
    %404 = vmatpush1.bf16.msra.mxu0 0
    %405 = vmatprep.subr.bf16.mxu0 0
    %406 = vmatpush1.bf16.msra.mxu0 0
    %407 = vmatprep.subr.bf16.mxu0 0
    %408 = vmatpush1.bf16.msra.mxu0 0
    %409 = vmatprep.subr.bf16.mxu0 0
    %410 = vmatpush1.bf16.msra.mxu0 0
    %411 = vmatprep.subr.bf16.mxu0 0
    %412 = vmatpush1.bf16.msra.mxu0 0
    %413 = vmatprep.subr.bf16.mxu0 0
    %414 = vmatpush1.bf16.msra.mxu0 0
    %415 = vmatprep.subr.bf16.mxu0 0
    %416 = vmatpush1.bf16.msra.mxu0 0
    %417 = vmatprep.subr.bf16.mxu0 0
    %418 = vmatpush1.bf16.msra.mxu0 0
    %419 = vmatprep.subr.bf16.mxu0 0
    %420 = vmatpush1.bf16.msra.mxu0 0
    %421 = vmatprep.subr.bf16.mxu0 0
    %422 = vmatpush1.bf16.msra.mxu0 0
    %423 = vmatprep.subr.bf16.mxu0 0
    %424 = vmatpush1.bf16.msra.mxu0 0
    %425 = vmatprep.subr.bf16.mxu0 0
    %426 = vmatpush1.bf16.msra.mxu0 0
    %427 = vmatprep.subr.bf16.mxu0 0
    %428 = vmatpush1.bf16.msra.mxu0 0
    %429 = vmatprep.subr.bf16.mxu0 0
    %430 = vmatpush1.bf16.msra.mxu0 0
    %431 = vmatprep.subr.bf16.mxu0 0
    %432 = vmatpush1.bf16.msra.mxu0 0
    %433 = vmatprep.mubr.bf16.mxu0 0
    %434 = vmatmul.mubr.bf16.gmra.mrb[0].mxu0 %v399
    %v435 = vpop.f32.mrb[0].mxu0
    %v436 = vadd.f32 0.0, %v435
    %v437 = vpop.f32.mrb[0].mxu0
    %v438 = vpop.f32.mrb[0].mxu0
    %v439 = vpop.f32.mrb[0].mxu0
    %440 = vdwg.mxu0
    %v441 = vmul.f32 %v436, %v436
    %v442 = vsel %vm132, %v441, 0.0
    %443 = vadd.xlane.f32.xlu0 %v442
    %v444 = vpop.xlane.xlu0 %443
    %v445 = vrot.slane %v444, 4
    %v446 = vadd.f32 %v444, %v445
    %v447 = vrot.slane %v446, 2
    %v448 = vadd.f32 %v446, %v447
    %v449 = vrot.slane %v448, 1
    %v450 = vadd.f32 %v448, %v449
    %s451 = vtos %v450
    %v452 = vstv %s451
    %v453 = vadd.f32 %v452, 1e-24
    %v454 = vrsqrt.pop %v453
    %v455 = vmul.f32 %v436, %v454
    %v456 = vpack.c.bf16 %v455, %v455
    %v458 = vsel %vm34, %v456, 0
    %460 = vmatprep.subr.bf16.mxu0 0
    %461 = vmatpush1.bf16.msra.mxu0 %v30
    %462 = vmatprep.subr.bf16.mxu0 0
    %463 = vmatpush1.bf16.msra.mxu0 %v31
    %464 = vmatprep.subr.bf16.mxu0 0
    %465 = vmatpush1.bf16.msra.mxu0 0
    %466 = vmatprep.subr.bf16.mxu0 0
    %467 = vmatpush1.bf16.msra.mxu0 0
    %468 = vmatprep.subr.bf16.mxu0 0
    %469 = vmatpush1.bf16.msra.mxu0 0
    %470 = vmatprep.subr.bf16.mxu0 0
    %471 = vmatpush1.bf16.msra.mxu0 0
    %472 = vmatprep.subr.bf16.mxu0 0
    %473 = vmatpush1.bf16.msra.mxu0 0
    %474 = vmatprep.subr.bf16.mxu0 0
    %475 = vmatpush1.bf16.msra.mxu0 0
    %476 = vmatprep.subr.bf16.mxu0 0
    %477 = vmatpush1.bf16.msra.mxu0 0
    %478 = vmatprep.subr.bf16.mxu0 0
    %479 = vmatpush1.bf16.msra.mxu0 0
    %480 = vmatprep.subr.bf16.mxu0 0
    %481 = vmatpush1.bf16.msra.mxu0 0
    %482 = vmatprep.subr.bf16.mxu0 0
    %483 = vmatpush1.bf16.msra.mxu0 0
    %484 = vmatprep.subr.bf16.mxu0 0
    %485 = vmatpush1.bf16.msra.mxu0 0
    %486 = vmatprep.subr.bf16.mxu0 0
    %487 = vmatpush1.bf16.msra.mxu0 0
    %488 = vmatprep.subr.bf16.mxu0 0
    %489 = vmatpush1.bf16.msra.mxu0 0
    %490 = vmatprep.subr.bf16.mxu0 0
    %491 = vmatpush1.bf16.msra.mxu0 0
    %492 = vmatprep.mubr.bf16.mxu0 0
    %493 = vmatmul.mubr.bf16.gmra.mrb[0].mxu0 %v458
    %v494 = vpop.f32.mrb[0].mxu0
    %v495 = vadd.f32 0.0, %v494
    %v496 = vpop.f32.mrb[0].mxu0
    %v497 = vpop.f32.mrb[0].mxu0
    %v498 = vpop.f32.mrb[0].mxu0
    %499 = vdwg.mxu0
    %v500 = vpack.c.bf16 %v495, %v495
    %v502 = vsel %vm87, %v500, 0
    %504 = vmatprep.subr.bf16.mxu0 0
    %505 = vmatpush1.bf16.msra.mxu0 %v85
    %506 = vmatprep.subr.bf16.mxu0 0
    %507 = vmatpush1.bf16.msra.mxu0 0
    %508 = vmatprep.subr.bf16.mxu0 0
    %509 = vmatpush1.bf16.msra.mxu0 0
    %510 = vmatprep.subr.bf16.mxu0 0
    %511 = vmatpush1.bf16.msra.mxu0 0
    %512 = vmatprep.subr.bf16.mxu0 0
    %513 = vmatpush1.bf16.msra.mxu0 0
    %514 = vmatprep.subr.bf16.mxu0 0
    %515 = vmatpush1.bf16.msra.mxu0 0
    %516 = vmatprep.subr.bf16.mxu0 0
    %517 = vmatpush1.bf16.msra.mxu0 0
    %518 = vmatprep.subr.bf16.mxu0 0
    %519 = vmatpush1.bf16.msra.mxu0 0
    %520 = vmatprep.subr.bf16.mxu0 0
    %521 = vmatpush1.bf16.msra.mxu0 0
    %522 = vmatprep.subr.bf16.mxu0 0
    %523 = vmatpush1.bf16.msra.mxu0 0
    %524 = vmatprep.subr.bf16.mxu0 0
    %525 = vmatpush1.bf16.msra.mxu0 0
    %526 = vmatprep.subr.bf16.mxu0 0
    %527 = vmatpush1.bf16.msra.mxu0 0
    %528 = vmatprep.subr.bf16.mxu0 0
    %529 = vmatpush1.bf16.msra.mxu0 0
    %530 = vmatprep.subr.bf16.mxu0 0
    %531 = vmatpush1.bf16.msra.mxu0 0
    %532 = vmatprep.subr.bf16.mxu0 0
    %533 = vmatpush1.bf16.msra.mxu0 0
    %534 = vmatprep.subr.bf16.mxu0 0
    %535 = vmatpush1.bf16.msra.mxu0 0
    %536 = vmatprep.mubr.bf16.mxu0 0
    %537 = vmatmul.mubr.bf16.gmra.mrb[0].mxu0 %v502
    %v538 = vpop.f32.mrb[0].mxu0
    %v539 = vadd.f32 0.0, %v538
    %v540 = vpop.f32.mrb[0].mxu0
    %v541 = vpop.f32.mrb[0].mxu0
    %v542 = vpop.f32.mrb[0].mxu0
    %543 = vdwg.mxu0
    %v544 = vmul.f32 %v539, %v539
    %v545 = vsel %vm132, %v544, 0.0
    %546 = vadd.xlane.f32.xlu0 %v545
    %v547 = vpop.xlane.xlu0 %546
    %v548 = vrot.slane %v547, 4
    %v549 = vadd.f32 %v547, %v548
    %v550 = vrot.slane %v549, 2
    %v551 = vadd.f32 %v549, %v550
    %v552 = vrot.slane %v551, 1
    %v553 = vadd.f32 %v551, %v552
    %s554 = vtos %v553
    %v555 = vstv %s554
    %v556 = vadd.f32 %v555, 1e-24
    %v557 = vrsqrt.pop %v556
    %v558 = vmul.f32 %v539, %v557
    %v559 = vpack.c.bf16 %v558, %v558
    %v561 = vsel %vm34, %v559, 0
    %563 = vmatprep.subr.bf16.mxu0 0
    %564 = vmatpush1.bf16.msra.mxu0 %v30
    %565 = vmatprep.subr.bf16.mxu0 0
    %566 = vmatpush1.bf16.msra.mxu0 %v31
    %567 = vmatprep.subr.bf16.mxu0 0
    %568 = vmatpush1.bf16.msra.mxu0 0
    %569 = vmatprep.subr.bf16.mxu0 0
    %570 = vmatpush1.bf16.msra.mxu0 0
    %571 = vmatprep.subr.bf16.mxu0 0
    %572 = vmatpush1.bf16.msra.mxu0 0
    %573 = vmatprep.subr.bf16.mxu0 0
    %574 = vmatpush1.bf16.msra.mxu0 0
    %575 = vmatprep.subr.bf16.mxu0 0
    %576 = vmatpush1.bf16.msra.mxu0 0
    %577 = vmatprep.subr.bf16.mxu0 0
    %578 = vmatpush1.bf16.msra.mxu0 0
    %579 = vmatprep.subr.bf16.mxu0 0
    %580 = vmatpush1.bf16.msra.mxu0 0
    %581 = vmatprep.subr.bf16.mxu0 0
    %582 = vmatpush1.bf16.msra.mxu0 0
    %583 = vmatprep.subr.bf16.mxu0 0
    %584 = vmatpush1.bf16.msra.mxu0 0
    %585 = vmatprep.subr.bf16.mxu0 0
    %586 = vmatpush1.bf16.msra.mxu0 0
    %587 = vmatprep.subr.bf16.mxu0 0
    %588 = vmatpush1.bf16.msra.mxu0 0
    %589 = vmatprep.subr.bf16.mxu0 0
    %590 = vmatpush1.bf16.msra.mxu0 0
    %591 = vmatprep.subr.bf16.mxu0 0
    %592 = vmatpush1.bf16.msra.mxu0 0
    %593 = vmatprep.subr.bf16.mxu0 0
    %594 = vmatpush1.bf16.msra.mxu0 0
    %595 = vmatprep.mubr.bf16.mxu0 0
    %596 = vmatmul.mubr.bf16.gmra.mrb[0].mxu0 %v561
    %v597 = vpop.f32.mrb[0].mxu0
    %v598 = vadd.f32 0.0, %v597
    %v599 = vpop.f32.mrb[0].mxu0
    %v600 = vpop.f32.mrb[0].mxu0
    %v601 = vpop.f32.mrb[0].mxu0
    %602 = vdwg.mxu0
    %v603 = vpack.c.bf16 %v598, %v598
    %v605 = vsel %vm87, %v603, 0
    %607 = vmatprep.subr.bf16.mxu0 0
    %608 = vmatpush1.bf16.msra.mxu0 %v85
    %609 = vmatprep.subr.bf16.mxu0 0
    %610 = vmatpush1.bf16.msra.mxu0 0
    %611 = vmatprep.subr.bf16.mxu0 0
    %612 = vmatpush1.bf16.msra.mxu0 0
    %613 = vmatprep.subr.bf16.mxu0 0
    %614 = vmatpush1.bf16.msra.mxu0 0
    %615 = vmatprep.subr.bf16.mxu0 0
    %616 = vmatpush1.bf16.msra.mxu0 0
    %617 = vmatprep.subr.bf16.mxu0 0
    %618 = vmatpush1.bf16.msra.mxu0 0
    %619 = vmatprep.subr.bf16.mxu0 0
    %620 = vmatpush1.bf16.msra.mxu0 0
    %621 = vmatprep.subr.bf16.mxu0 0
    %622 = vmatpush1.bf16.msra.mxu0 0
    %623 = vmatprep.subr.bf16.mxu0 0
    %624 = vmatpush1.bf16.msra.mxu0 0
    %625 = vmatprep.subr.bf16.mxu0 0
    %626 = vmatpush1.bf16.msra.mxu0 0
    %627 = vmatprep.subr.bf16.mxu0 0
    %628 = vmatpush1.bf16.msra.mxu0 0
    %629 = vmatprep.subr.bf16.mxu0 0
    %630 = vmatpush1.bf16.msra.mxu0 0
    %631 = vmatprep.subr.bf16.mxu0 0
    %632 = vmatpush1.bf16.msra.mxu0 0
    %633 = vmatprep.subr.bf16.mxu0 0
    %634 = vmatpush1.bf16.msra.mxu0 0
    %635 = vmatprep.subr.bf16.mxu0 0
    %636 = vmatpush1.bf16.msra.mxu0 0
    %637 = vmatprep.subr.bf16.mxu0 0
    %638 = vmatpush1.bf16.msra.mxu0 0
    %639 = vmatprep.mubr.bf16.mxu0 0
    %640 = vmatmul.mubr.bf16.gmra.mrb[0].mxu0 %v605
    %v641 = vpop.f32.mrb[0].mxu0
    %v642 = vadd.f32 0.0, %v641
    %v643 = vpop.f32.mrb[0].mxu0
    %v644 = vpop.f32.mrb[0].mxu0
    %v645 = vpop.f32.mrb[0].mxu0
    %646 = vdwg.mxu0
    %v647 = vmul.f32 %v642, %v642
    %v648 = vsel %vm132, %v647, 0.0
    %649 = vadd.xlane.f32.xlu0 %v648
    %v650 = vpop.xlane.xlu0 %649
    %v651 = vrot.slane %v650, 4
    %v652 = vadd.f32 %v650, %v651
    %v653 = vrot.slane %v652, 2
    %v654 = vadd.f32 %v652, %v653
    %v655 = vrot.slane %v654, 1
    %v656 = vadd.f32 %v654, %v655
    %s657 = vtos %v656
    %v658 = vstv %s657
    %v659 = vadd.f32 %v658, 1e-24
    %v660 = vrsqrt.pop %v659
    %v661 = vmul.f32 %v642, %v660
    %v662 = vpack.c.bf16 %v661, %v661
    %v664 = vsel %vm34, %v662, 0
    %666 = vmatprep.subr.bf16.mxu0 0
    %667 = vmatpush1.bf16.msra.mxu0 %v30
    %668 = vmatprep.subr.bf16.mxu0 0
    %669 = vmatpush1.bf16.msra.mxu0 %v31
    %670 = vmatprep.subr.bf16.mxu0 0
    %671 = vmatpush1.bf16.msra.mxu0 0
    %672 = vmatprep.subr.bf16.mxu0 0
    %673 = vmatpush1.bf16.msra.mxu0 0
    %674 = vmatprep.subr.bf16.mxu0 0
    %675 = vmatpush1.bf16.msra.mxu0 0
    %676 = vmatprep.subr.bf16.mxu0 0
    %677 = vmatpush1.bf16.msra.mxu0 0
    %678 = vmatprep.subr.bf16.mxu0 0
    %679 = vmatpush1.bf16.msra.mxu0 0
    %680 = vmatprep.subr.bf16.mxu0 0
    %681 = vmatpush1.bf16.msra.mxu0 0
    %682 = vmatprep.subr.bf16.mxu0 0
    %683 = vmatpush1.bf16.msra.mxu0 0
    %684 = vmatprep.subr.bf16.mxu0 0
    %685 = vmatpush1.bf16.msra.mxu0 0
    %686 = vmatprep.subr.bf16.mxu0 0
    %687 = vmatpush1.bf16.msra.mxu0 0
    %688 = vmatprep.subr.bf16.mxu0 0
    %689 = vmatpush1.bf16.msra.mxu0 0
    %690 = vmatprep.subr.bf16.mxu0 0
    %691 = vmatpush1.bf16.msra.mxu0 0
    %692 = vmatprep.subr.bf16.mxu0 0
    %693 = vmatpush1.bf16.msra.mxu0 0
    %694 = vmatprep.subr.bf16.mxu0 0
    %695 = vmatpush1.bf16.msra.mxu0 0
    %696 = vmatprep.subr.bf16.mxu0 0
    %697 = vmatpush1.bf16.msra.mxu0 0
    %698 = vmatprep.mubr.bf16.mxu0 0
    %699 = vmatmul.mubr.bf16.gmra.mrb[0].mxu0 %v664
    %v700 = vpop.f32.mrb[0].mxu0
    %v701 = vadd.f32 0.0, %v700
    %v702 = vpop.f32.mrb[0].mxu0
    %v703 = vpop.f32.mrb[0].mxu0
    %v704 = vpop.f32.mrb[0].mxu0
    %705 = vdwg.mxu0
    %v706 = vpack.c.bf16 %v701, %v701
    %v708 = vsel %vm87, %v706, 0
    %710 = vmatprep.subr.bf16.mxu0 0
    %711 = vmatpush1.bf16.msra.mxu0 %v85
    %712 = vmatprep.subr.bf16.mxu0 0
    %713 = vmatpush1.bf16.msra.mxu0 0
    %714 = vmatprep.subr.bf16.mxu0 0
    %715 = vmatpush1.bf16.msra.mxu0 0
    %716 = vmatprep.subr.bf16.mxu0 0
    %717 = vmatpush1.bf16.msra.mxu0 0
    %718 = vmatprep.subr.bf16.mxu0 0
    %719 = vmatpush1.bf16.msra.mxu0 0
    %720 = vmatprep.subr.bf16.mxu0 0
    %721 = vmatpush1.bf16.msra.mxu0 0
    %722 = vmatprep.subr.bf16.mxu0 0
    %723 = vmatpush1.bf16.msra.mxu0 0
    %724 = vmatprep.subr.bf16.mxu0 0
    %725 = vmatpush1.bf16.msra.mxu0 0
    %726 = vmatprep.subr.bf16.mxu0 0
    %727 = vmatpush1.bf16.msra.mxu0 0
    %728 = vmatprep.subr.bf16.mxu0 0
    %729 = vmatpush1.bf16.msra.mxu0 0
    %730 = vmatprep.subr.bf16.mxu0 0
    %731 = vmatpush1.bf16.msra.mxu0 0
    %732 = vmatprep.subr.bf16.mxu0 0
    %733 = vmatpush1.bf16.msra.mxu0 0
    %734 = vmatprep.subr.bf16.mxu0 0
    %735 = vmatpush1.bf16.msra.mxu0 0
    %736 = vmatprep.subr.bf16.mxu0 0
    %737 = vmatpush1.bf16.msra.mxu0 0
    %738 = vmatprep.subr.bf16.mxu0 0
    %739 = vmatpush1.bf16.msra.mxu0 0
    %740 = vmatprep.subr.bf16.mxu0 0
    %741 = vmatpush1.bf16.msra.mxu0 0
    %742 = vmatprep.mubr.bf16.mxu0 0
    %743 = vmatmul.mubr.bf16.gmra.mrb[0].mxu0 %v708
    %v744 = vpop.f32.mrb[0].mxu0
    %v745 = vadd.f32 0.0, %v744
    %v746 = vpop.f32.mrb[0].mxu0
    %v747 = vpop.f32.mrb[0].mxu0
    %v748 = vpop.f32.mrb[0].mxu0
    %749 = vdwg.mxu0
    %v750 = vmul.f32 %v745, %v745
    %v751 = vsel %vm132, %v750, 0.0
    %752 = vadd.xlane.f32.xlu0 %v751
    %v753 = vpop.xlane.xlu0 %752
    %v754 = vrot.slane %v753, 4
    %v755 = vadd.f32 %v753, %v754
    %v756 = vrot.slane %v755, 2
    %v757 = vadd.f32 %v755, %v756
    %v758 = vrot.slane %v757, 1
    %v759 = vadd.f32 %v757, %v758
    %s760 = vtos %v759
    %v761 = vstv %s760
    %v762 = vadd.f32 %v761, 1e-24
    %v763 = vrsqrt.pop %v762
    %v764 = vmul.f32 %v745, %v763
    %v765 = vpack.c.bf16 %v764, %v764
    %v767 = vsel %vm34, %v765, 0
    %769 = vmatprep.subr.bf16.mxu0 0
    %770 = vmatpush1.bf16.msra.mxu0 %v30
    %771 = vmatprep.subr.bf16.mxu0 0
    %772 = vmatpush1.bf16.msra.mxu0 %v31
    %773 = vmatprep.subr.bf16.mxu0 0
    %774 = vmatpush1.bf16.msra.mxu0 0
    %775 = vmatprep.subr.bf16.mxu0 0
    %776 = vmatpush1.bf16.msra.mxu0 0
    %777 = vmatprep.subr.bf16.mxu0 0
    %778 = vmatpush1.bf16.msra.mxu0 0
    %779 = vmatprep.subr.bf16.mxu0 0
    %780 = vmatpush1.bf16.msra.mxu0 0
    %781 = vmatprep.subr.bf16.mxu0 0
    %782 = vmatpush1.bf16.msra.mxu0 0
    %783 = vmatprep.subr.bf16.mxu0 0
    %784 = vmatpush1.bf16.msra.mxu0 0
    %785 = vmatprep.subr.bf16.mxu0 0
    %786 = vmatpush1.bf16.msra.mxu0 0
    %787 = vmatprep.subr.bf16.mxu0 0
    %788 = vmatpush1.bf16.msra.mxu0 0
    %789 = vmatprep.subr.bf16.mxu0 0
    %790 = vmatpush1.bf16.msra.mxu0 0
    %791 = vmatprep.subr.bf16.mxu0 0
    %792 = vmatpush1.bf16.msra.mxu0 0
    %793 = vmatprep.subr.bf16.mxu0 0
    %794 = vmatpush1.bf16.msra.mxu0 0
    %795 = vmatprep.subr.bf16.mxu0 0
    %796 = vmatpush1.bf16.msra.mxu0 0
    %797 = vmatprep.subr.bf16.mxu0 0
    %798 = vmatpush1.bf16.msra.mxu0 0
    %799 = vmatprep.subr.bf16.mxu0 0
    %800 = vmatpush1.bf16.msra.mxu0 0
    %801 = vmatprep.mubr.bf16.mxu0 0
    %802 = vmatmul.mubr.bf16.gmra.mrb[0].mxu0 %v767
    %v803 = vpop.f32.mrb[0].mxu0
    %v804 = vadd.f32 0.0, %v803
    %v805 = vpop.f32.mrb[0].mxu0
    %v806 = vpop.f32.mrb[0].mxu0
    %v807 = vpop.f32.mrb[0].mxu0
    %808 = vdwg.mxu0
    %v809 = vpack.c.bf16 %v804, %v804
    %v811 = vsel %vm87, %v809, 0
    %813 = vmatprep.subr.bf16.mxu0 0
    %814 = vmatpush1.bf16.msra.mxu0 %v85
    %815 = vmatprep.subr.bf16.mxu0 0
    %816 = vmatpush1.bf16.msra.mxu0 0
    %817 = vmatprep.subr.bf16.mxu0 0
    %818 = vmatpush1.bf16.msra.mxu0 0
    %819 = vmatprep.subr.bf16.mxu0 0
    %820 = vmatpush1.bf16.msra.mxu0 0
    %821 = vmatprep.subr.bf16.mxu0 0
    %822 = vmatpush1.bf16.msra.mxu0 0
    %823 = vmatprep.subr.bf16.mxu0 0
    %824 = vmatpush1.bf16.msra.mxu0 0
    %825 = vmatprep.subr.bf16.mxu0 0
    %826 = vmatpush1.bf16.msra.mxu0 0
    %827 = vmatprep.subr.bf16.mxu0 0
    %828 = vmatpush1.bf16.msra.mxu0 0
    %829 = vmatprep.subr.bf16.mxu0 0
    %830 = vmatpush1.bf16.msra.mxu0 0
    %831 = vmatprep.subr.bf16.mxu0 0
    %832 = vmatpush1.bf16.msra.mxu0 0
    %833 = vmatprep.subr.bf16.mxu0 0
    %834 = vmatpush1.bf16.msra.mxu0 0
    %835 = vmatprep.subr.bf16.mxu0 0
    %836 = vmatpush1.bf16.msra.mxu0 0
    %837 = vmatprep.subr.bf16.mxu0 0
    %838 = vmatpush1.bf16.msra.mxu0 0
    %839 = vmatprep.subr.bf16.mxu0 0
    %840 = vmatpush1.bf16.msra.mxu0 0
    %841 = vmatprep.subr.bf16.mxu0 0
    %842 = vmatpush1.bf16.msra.mxu0 0
    %843 = vmatprep.subr.bf16.mxu0 0
    %844 = vmatpush1.bf16.msra.mxu0 0
    %845 = vmatprep.mubr.bf16.mxu0 0
    %846 = vmatmul.mubr.bf16.gmra.mrb[0].mxu0 %v811
    %v847 = vpop.f32.mrb[0].mxu0
    %v848 = vadd.f32 0.0, %v847
    %v849 = vpop.f32.mrb[0].mxu0
    %v850 = vpop.f32.mrb[0].mxu0
    %v851 = vpop.f32.mrb[0].mxu0
    %852 = vdwg.mxu0
    %v853 = vmul.f32 %v848, %v848
    %v854 = vsel %vm132, %v853, 0.0
    %855 = vadd.xlane.f32.xlu0 %v854
    %v856 = vpop.xlane.xlu0 %855
    %v857 = vrot.slane %v856, 4
    %v858 = vadd.f32 %v856, %v857
    %v859 = vrot.slane %v858, 2
    %v860 = vadd.f32 %v858, %v859
    %v861 = vrot.slane %v860, 1
    %v862 = vadd.f32 %v860, %v861
    %s863 = vtos %v862
    %v864 = vstv %s863
    %v865 = vadd.f32 %v864, 1e-24
    %v866 = vrsqrt.pop %v865
    %v867 = vmul.f32 %v848, %v866
    %v868 = vpack.c.bf16 %v867, %v867
    %v870 = vsel %vm34, %v868, 0
    %872 = vmatprep.subr.bf16.mxu0 0
    %873 = vmatpush1.bf16.msra.mxu0 %v30
    %874 = vmatprep.subr.bf16.mxu0 0
    %875 = vmatpush1.bf16.msra.mxu0 %v31
    %876 = vmatprep.subr.bf16.mxu0 0
    %877 = vmatpush1.bf16.msra.mxu0 0
    %878 = vmatprep.subr.bf16.mxu0 0
    %879 = vmatpush1.bf16.msra.mxu0 0
    %880 = vmatprep.subr.bf16.mxu0 0
    %881 = vmatpush1.bf16.msra.mxu0 0
    %882 = vmatprep.subr.bf16.mxu0 0
    %883 = vmatpush1.bf16.msra.mxu0 0
    %884 = vmatprep.subr.bf16.mxu0 0
    %885 = vmatpush1.bf16.msra.mxu0 0
    %886 = vmatprep.subr.bf16.mxu0 0
    %887 = vmatpush1.bf16.msra.mxu0 0
    %888 = vmatprep.subr.bf16.mxu0 0
    %889 = vmatpush1.bf16.msra.mxu0 0
    %890 = vmatprep.subr.bf16.mxu0 0
    %891 = vmatpush1.bf16.msra.mxu0 0
    %892 = vmatprep.subr.bf16.mxu0 0
    %893 = vmatpush1.bf16.msra.mxu0 0
    %894 = vmatprep.subr.bf16.mxu0 0
    %895 = vmatpush1.bf16.msra.mxu0 0
    %896 = vmatprep.subr.bf16.mxu0 0
    %897 = vmatpush1.bf16.msra.mxu0 0
    %898 = vmatprep.subr.bf16.mxu0 0
    %899 = vmatpush1.bf16.msra.mxu0 0
    %900 = vmatprep.subr.bf16.mxu0 0
    %901 = vmatpush1.bf16.msra.mxu0 0
    %902 = vmatprep.subr.bf16.mxu0 0
    %903 = vmatpush1.bf16.msra.mxu0 0
    %904 = vmatprep.mubr.bf16.mxu0 0
    %905 = vmatmul.mubr.bf16.gmra.mrb[0].mxu0 %v870
    %v906 = vpop.f32.mrb[0].mxu0
    %v907 = vadd.f32 0.0, %v906
    %v908 = vpop.f32.mrb[0].mxu0
    %v909 = vpop.f32.mrb[0].mxu0
    %v910 = vpop.f32.mrb[0].mxu0
    %911 = vdwg.mxu0
    %v912 = vpack.c.bf16 %v907, %v907
    %v914 = vsel %vm87, %v912, 0
    %916 = vmatprep.subr.bf16.mxu0 0
    %917 = vmatpush1.bf16.msra.mxu0 %v85
    %918 = vmatprep.subr.bf16.mxu0 0
    %919 = vmatpush1.bf16.msra.mxu0 0
    %920 = vmatprep.subr.bf16.mxu0 0
    %921 = vmatpush1.bf16.msra.mxu0 0
    %922 = vmatprep.subr.bf16.mxu0 0
    %923 = vmatpush1.bf16.msra.mxu0 0
    %924 = vmatprep.subr.bf16.mxu0 0
    %925 = vmatpush1.bf16.msra.mxu0 0
    %926 = vmatprep.subr.bf16.mxu0 0
    %927 = vmatpush1.bf16.msra.mxu0 0
    %928 = vmatprep.subr.bf16.mxu0 0
    %929 = vmatpush1.bf16.msra.mxu0 0
    %930 = vmatprep.subr.bf16.mxu0 0
    %931 = vmatpush1.bf16.msra.mxu0 0
    %932 = vmatprep.subr.bf16.mxu0 0
    %933 = vmatpush1.bf16.msra.mxu0 0
    %934 = vmatprep.subr.bf16.mxu0 0
    %935 = vmatpush1.bf16.msra.mxu0 0
    %936 = vmatprep.subr.bf16.mxu0 0
    %937 = vmatpush1.bf16.msra.mxu0 0
    %938 = vmatprep.subr.bf16.mxu0 0
    %939 = vmatpush1.bf16.msra.mxu0 0
    %940 = vmatprep.subr.bf16.mxu0 0
    %941 = vmatpush1.bf16.msra.mxu0 0
    %942 = vmatprep.subr.bf16.mxu0 0
    %943 = vmatpush1.bf16.msra.mxu0 0
    %944 = vmatprep.subr.bf16.mxu0 0
    %945 = vmatpush1.bf16.msra.mxu0 0
    %946 = vmatprep.subr.bf16.mxu0 0
    %947 = vmatpush1.bf16.msra.mxu0 0
    %948 = vmatprep.mubr.bf16.mxu0 0
    %949 = vmatmul.mubr.bf16.gmra.mrb[0].mxu0 %v914
    %v950 = vpop.f32.mrb[0].mxu0
    %v951 = vadd.f32 0.0, %v950
    %v952 = vpop.f32.mrb[0].mxu0
    %v953 = vpop.f32.mrb[0].mxu0
    %v954 = vpop.f32.mrb[0].mxu0
    %955 = vdwg.mxu0
    %v956 = vmul.f32 %v951, %v951
    %v957 = vsel %vm132, %v956, 0.0
    %958 = vadd.xlane.f32.xlu0 %v957
    %v959 = vpop.xlane.xlu0 %958
    %v960 = vrot.slane %v959, 4
    %v961 = vadd.f32 %v959, %v960
    %v962 = vrot.slane %v961, 2
    %v963 = vadd.f32 %v961, %v962
    %v964 = vrot.slane %v963, 1
    %v965 = vadd.f32 %v963, %v964
    %s966 = vtos %v965
    %v967 = vstv %s966
    %v968 = vadd.f32 %v967, 1e-24
    %v969 = vrsqrt.pop %v968
    %v970 = vmul.f32 %v951, %v969
    %v971 = vpack.c.bf16 %v970, %v970
    %v973 = vsel %vm34, %v971, 0
    %975 = vmatprep.subr.bf16.mxu0 0
    %976 = vmatpush1.bf16.msra.mxu0 %v30
    %977 = vmatprep.subr.bf16.mxu0 0
    %978 = vmatpush1.bf16.msra.mxu0 %v31
    %979 = vmatprep.subr.bf16.mxu0 0
    %980 = vmatpush1.bf16.msra.mxu0 0
    %981 = vmatprep.subr.bf16.mxu0 0
    %982 = vmatpush1.bf16.msra.mxu0 0
    %983 = vmatprep.subr.bf16.mxu0 0
    %984 = vmatpush1.bf16.msra.mxu0 0
    %985 = vmatprep.subr.bf16.mxu0 0
    %986 = vmatpush1.bf16.msra.mxu0 0
    %987 = vmatprep.subr.bf16.mxu0 0
    %988 = vmatpush1.bf16.msra.mxu0 0
    %989 = vmatprep.subr.bf16.mxu0 0
    %990 = vmatpush1.bf16.msra.mxu0 0
    %991 = vmatprep.subr.bf16.mxu0 0
    %992 = vmatpush1.bf16.msra.mxu0 0
    %993 = vmatprep.subr.bf16.mxu0 0
    %994 = vmatpush1.bf16.msra.mxu0 0
    %995 = vmatprep.subr.bf16.mxu0 0
    %996 = vmatpush1.bf16.msra.mxu0 0
    %997 = vmatprep.subr.bf16.mxu0 0
    %998 = vmatpush1.bf16.msra.mxu0 0
    %999 = vmatprep.subr.bf16.mxu0 0
    %1000 = vmatpush1.bf16.msra.mxu0 0
    %1001 = vmatprep.subr.bf16.mxu0 0
    %1002 = vmatpush1.bf16.msra.mxu0 0
    %1003 = vmatprep.subr.bf16.mxu0 0
    %1004 = vmatpush1.bf16.msra.mxu0 0
    %1005 = vmatprep.subr.bf16.mxu0 0
    %1006 = vmatpush1.bf16.msra.mxu0 0
    %1007 = vmatprep.mubr.bf16.mxu0 0
    %1008 = vmatmul.mubr.bf16.gmra.mrb[0].mxu0 %v973
    %v1009 = vpop.f32.mrb[0].mxu0
    %v1010 = vadd.f32 0.0, %v1009
    %v1011 = vpop.f32.mrb[0].mxu0
    %v1012 = vpop.f32.mrb[0].mxu0
    %v1013 = vpop.f32.mrb[0].mxu0
    %1014 = vdwg.mxu0
    %v1015 = vmul.f32 %v1010, %v1010
    %vm1016 = vcmask 122880
    %v1017 = vsel %vm1016, %v1015, 0.0
    %1018 = vadd.xlane.f32.xlu0 %v1017
    %v1019 = vpop.xlane.xlu0 %1018
    %v1020 = vrot.slane %v1019, 4
    %v1021 = vadd.f32 %v1019, %v1020
    %v1022 = vrot.slane %v1021, 2
    %v1023 = vadd.f32 %v1021, %v1022
    %v1024 = vrot.slane %v1023, 1
    %v1025 = vadd.f32 %v1023, %v1024
    %s1026 = vtos %v1025
    %v1027 = vstv %s1026
    %v1028 = vpack.c.bf16 %v1010, %v1010
    %v1030 = vsel %vm87, %v1028, 0
    %1032 = vmatprep.subr.bf16.mxu0 0
    %1033 = vmatpush1.bf16.msra.mxu0 %v85
    %1034 = vmatprep.subr.bf16.mxu0 0
    %1035 = vmatpush1.bf16.msra.mxu0 0
    %1036 = vmatprep.subr.bf16.mxu0 0
    %1037 = vmatpush1.bf16.msra.mxu0 0
    %1038 = vmatprep.subr.bf16.mxu0 0
    %1039 = vmatpush1.bf16.msra.mxu0 0
    %1040 = vmatprep.subr.bf16.mxu0 0
    %1041 = vmatpush1.bf16.msra.mxu0 0
    %1042 = vmatprep.subr.bf16.mxu0 0
    %1043 = vmatpush1.bf16.msra.mxu0 0
    %1044 = vmatprep.subr.bf16.mxu0 0
    %1045 = vmatpush1.bf16.msra.mxu0 0
    %1046 = vmatprep.subr.bf16.mxu0 0
    %1047 = vmatpush1.bf16.msra.mxu0 0
    %1048 = vmatprep.subr.bf16.mxu0 0
    %1049 = vmatpush1.bf16.msra.mxu0 0
    %1050 = vmatprep.subr.bf16.mxu0 0
    %1051 = vmatpush1.bf16.msra.mxu0 0
    %1052 = vmatprep.subr.bf16.mxu0 0
    %1053 = vmatpush1.bf16.msra.mxu0 0
    %1054 = vmatprep.subr.bf16.mxu0 0
    %1055 = vmatpush1.bf16.msra.mxu0 0
    %1056 = vmatprep.subr.bf16.mxu0 0
    %1057 = vmatpush1.bf16.msra.mxu0 0
    %1058 = vmatprep.subr.bf16.mxu0 0
    %1059 = vmatpush1.bf16.msra.mxu0 0
    %1060 = vmatprep.subr.bf16.mxu0 0
    %1061 = vmatpush1.bf16.msra.mxu0 0
    %1062 = vmatprep.subr.bf16.mxu0 0
    %1063 = vmatpush1.bf16.msra.mxu0 0
    %1064 = vmatprep.mubr.bf16.mxu0 0
    %1065 = vmatmul.mubr.bf16.gmra.mrb[0].mxu0 %v1030
    %v1066 = vpop.f32.mrb[0].mxu0
    %v1067 = vadd.f32 0.0, %v1066
    %v1068 = vpop.f32.mrb[0].mxu0
    %v1069 = vpop.f32.mrb[0].mxu0
    %v1070 = vpop.f32.mrb[0].mxu0
    %1071 = vdwg.mxu0
    %v1072 = vmul.f32 %v1067, %v1067
    %v1073 = vsel %vm132, %v1072, 0.0
    %1074 = vadd.xlane.f32.xlu0 %v1073
    %v1075 = vpop.xlane.xlu0 %1074
    %v1076 = vrot.slane %v1075, 4
    %v1077 = vadd.f32 %v1075, %v1076
    %v1078 = vrot.slane %v1077, 2
    %v1079 = vadd.f32 %v1077, %v1078
    %v1080 = vrot.slane %v1079, 1
    %v1081 = vadd.f32 %v1079, %v1080
    %s1082 = vtos %v1081
    %v1083 = vstv %s1082
    %v1084 = vrsqrt.pop %v1083
    %v1085 = vmul.f32 %v1083, %v1084
    %vm1086 = vcmp.eq.f32.partialorder %v1083, inf
    %v1087 = vsel %vm1086, %v1083, %v1085
    %vm1088 = vcmp.eq.f32.partialorder %v1083, 0.0
    %v1089 = vand.u32 %v1083, 2147483648
    %v1090 = vsel %vm1088, %v1089, %v1087
    %v1091 = vadd.f32 %v1027, 1e-24
    %v1092 = vrsqrt.pop %v1091
    %v1093 = vmul.f32 %v1090, %v1092
    %vm1094 = vcmask 0
    %1095 = vst.msk [vmem:[#allocation2] sm:$0x1] %vm1094, %v1093
    // Predicated region
    $region14: #{tpu_custom_call.1} parent=1 // pred_check
      _
    $region15: #{tpu_custom_call.1} parent=1 // pred_check_branch
      %1097 = sbr.rel (0) target = $region17
    $region16: #{tpu_custom_call.1} parent=1 // pred_region
      %s1099 = ssub.s32 16, 16
      %1100 = vsyncadd [#allocation3], %s1099
      %s1102 = sshll.u32 [#allocation2], 4
      %s1103 = int_to_ptr.vmem [resolvable:$true] %s1102
      %1105 = dma.vmem_to_hbm [thread:$0]  %s1103, 16, %s3, [#allocation3]
    $region17: #{tpu_custom_call.1} parent=1 // pred_fallthru
      _
    // Predicated region
    $region18: #{tpu_custom_call.1} parent=1 // pred_check
      _
    $region19: #{tpu_custom_call.1} parent=1 // pred_check_branch
      %1107 = sbr.rel (0) target = $region21
    $region20: #{tpu_custom_call.1} parent=1 // pred_region
      %1108 = dma.done [#allocation3], 16
    $region21: #{tpu_custom_call.1} parent=1 // pred_fallthru
      _
    %1109 = vsyncpa [#allocation3], 1

</llo_original>
